<compile_context>
chip_gen: v5e
topology: v5e:2x2
jax: 0.10.0
libtpu: 0.0.40
codegen_flags: <defaults>
</compile_context>

<pallas_src>
import jax
import jax.numpy as jnp
from jax import lax
from jax.experimental import pallas as pl
from jax.experimental.pallas import tpu as pltpu

# ---- model dims (small, but consistent with the module's fixed dims) ----
B = 2           # batch
S = 8           # feature-extractor sequence length
N = 8           # text rows
F_IN = 333      # fmri_indim = 333
F_PAD = 384     # F_IN padded to a multiple of 128 (two pad columns carry biases)
D = 512         # linear_layer = nn.Linear(512, 512)
NUM_TASKS = 28
T_PAD = 128     # NUM_TASKS padded to a full lane tile
EPS = 1e-8      # F.cosine_similarity eps


def combined_kernel(fmri_ref, tsc_t_ref,
                    w_ext_ref, w_comb_ref,
                    w_head_ref, head_text_ref,
                    pred_ref):
    # Whole batch in one shot: fmri is (B*S, F_PAD) with bias columns baked in.
    fmri = fmri_ref[...]

    # --- two independent MXU pushes from the same LHS (no serial dependence) ---
    # feats = image_feature_extractor(fmri)           (bias folded into col 333)
    feats = jnp.dot(fmri, w_ext_ref[...],
                    preferred_element_type=jnp.float32)                      # (B*S, D)
    # f1 = linear_layer(feats) via precomputed combined weight (biases in rows 333/334)
    f1 = jnp.dot(fmri, w_comb_ref[...],
                 preferred_element_type=jnp.float32)                         # (B*S, D)

    # --- cosine similarity vs pre-normalized, pre-transposed text ---
    ss = jnp.sum(f1 * f1, axis=1, keepdims=True)                             # (B*S, 1)
    inv_f1 = 1.0 / jnp.maximum(jnp.sqrt(ss), EPS)                            # (B*S, 1)
    dots = jnp.dot(f1, tsc_t_ref[...],
                   preferred_element_type=jnp.float32)                       # (B*S, N)
    sim = dots * inv_f1                                                      # (B*S, N)

    # exp + per-batch normalization over the sequence (torch dim=1) axis.
    # NOTE: no max-subtraction needed -- sim is a cosine similarity, bounded
    # in [-1, 1], so exp() cannot overflow.  Revisit if 'sim' ever changes.
    e = jnp.exp(sim)

    w_head = w_head_ref[...]            # (D, T_PAD)   (top half of the head)
    head_text = head_text_ref[...]      # (N, T_PAD)   (batch-invariant text term)

    for b in range(B):                  # B=2, static unroll
        e_b = e[b * S:(b + 1) * S]                                           # (S, N)
        feats_b = feats[b * S:(b + 1) * S]                                   # (S, D)
        inv_den = 1.0 / jnp.sum(e_b, axis=0, keepdims=True)                  # (1, N)
        norm_b = e_b * inv_den                                               # (S, N)
        # features_mean^T for this batch: contract over S -> (N, D)
        fm_b = lax.dot_general(norm_b, feats_b,
                               dimension_numbers=(((0,), (0,)), ((), ())),
                               preferred_element_type=jnp.float32)           # (N, D)
        pred_ref[b] = jnp.dot(fm_b, w_head,
                              preferred_element_type=jnp.float32) + head_text


def prepare_params(params, text):
    """One-time precompute, hoisted out of the per-call forward path."""
    text1 = text[1]                                                          # (N, D)

    # pre-normalized AND pre-transposed text: cosine dot is a plain matmul
    t_norm = jnp.sqrt(jnp.sum(text1 * text1, axis=1, keepdims=True))         # (N, 1)
    tsc_t = (text1 / jnp.maximum(t_norm, EPS)).T                             # (D, N)

    # concat eliminated: head(combine) = feats_mean @ W[:D] + (text1 @ W[D:] + b)
    head_text = jnp.dot(text1, params["w_head"][D:]) + params["b_head"]      # (N, 28)
    head_text_p = jnp.zeros((N, T_PAD), jnp.float32).at[:, :NUM_TASKS].set(head_text)
    w_head_top_p = jnp.zeros((D, T_PAD), jnp.float32).at[:, :NUM_TASKS].set(
        params["w_head"][:D])

    # augmented extractor weight: rows [:333]=w_ext, row 333=b_ext (1.0 column
    # in fmri_aug picks it up), rows 334.. = 0
    w_ext_aug = (jnp.zeros((F_PAD, D), jnp.float32)
                 .at[:F_IN].set(params["w_ext"])
                 .at[F_IN].set(params["b_ext"][0]))

    # combined weight for f1 = linear_layer(extractor(fmri)):
    #   rows [:334] = w_ext_aug @ w_lin  (includes b_ext @ w_lin via row 333)
    #   row 334     = b_lin              (second 1.0 column in fmri_aug)
    w_comb_aug = (w_ext_aug @ params["w_lin"]).at[F_IN + 1].set(params["b_lin"][0])

    prepared = {
        "tsc_t": tsc_t,
        "w_ext_aug": w_ext_aug,
        "w_comb_aug": w_comb_aug,
        "w_head_top_p": w_head_top_p,
        "head_text_p": head_text_p,
    }
    return jax.tree_util.tree_map(jax.block_until_ready, prepared)


@jax.jit
def _forward_pallas(fmri, tsc_t, w_ext_aug, w_comb_aug, w_head_top_p, head_text_p):
    # per-call work: only a tiny (16,384) input augmentation + the pallas_call
    fmri_flat = fmri.reshape(B * S, F_IN).astype(jnp.float32)
    fmri_aug = jnp.concatenate(
        [fmri_flat,
         jnp.ones((B * S, 2), jnp.float32),                 # bias columns 333, 334
         jnp.zeros((B * S, F_PAD - F_IN - 2), jnp.float32)],
        axis=1)                                                              # (B*S, 384)

    pred_p = pl.pallas_call(
        combined_kernel,
        out_shape=jax.ShapeDtypeStruct((B, N, T_PAD), jnp.float32),
        grid_spec=pltpu.PrefetchScalarGridSpec(
            num_scalar_prefetch=0,
            grid=(1,),
            in_specs=[
                pl.BlockSpec((B * S, F_PAD), lambda i: (0, 0)),   # fmri (augmented)
                pl.BlockSpec((D, N), lambda i: (0, 0)),           # text^T (pre-normalized)
                pl.BlockSpec((F_PAD, D), lambda i: (0, 0)),       # w_ext (augmented)
                pl.BlockSpec((F_PAD, D), lambda i: (0, 0)),       # w_ext @ w_lin (augmented)
                pl.BlockSpec((D, T_PAD), lambda i: (0, 0)),       # w_head top (padded)
                pl.BlockSpec((N, T_PAD), lambda i: (0, 0)),       # head_text (padded)
            ],
            out_specs=pl.BlockSpec((B, N, T_PAD), lambda i: (0, 0, 0)),
        ),
        compiler_params=pltpu.CompilerParams(
            dimension_semantics=("arbitrary",)),
    )(fmri_aug, tsc_t, w_ext_aug, w_comb_aug, w_head_top_p, head_text_p)

    return pred_p[:, :, :NUM_TASKS]


def combined_model_forward(fmri, prepared, params):
    """fmri: (B, S, F_IN) f32; prepared: output of prepare_params (cached)."""
    pred = _forward_pallas(fmri, prepared["tsc_t"], prepared["w_ext_aug"],
                           prepared["w_comb_aug"], prepared["w_head_top_p"],
                           prepared["head_text_p"])
    return pred, params["regress_para"]


def reference_forward(fmri, text, params):
    """Pure-JAX reference replicating the torch module's math (for verification)."""
    text1 = jnp.broadcast_to(text[1][None], (B, N, D))                       # (B, N, D)
    feats = jnp.einsum("bsf,fd->bsd", fmri, params["w_ext"]) + params["b_ext"]
    f1 = jnp.einsum("bsd,de->bse", feats, params["w_lin"]) + params["b_lin"]
    f1n = f1 / jnp.maximum(jnp.linalg.norm(f1, axis=-1, keepdims=True), EPS)
    t1n = text1 / jnp.maximum(jnp.linalg.norm(text1, axis=-1, keepdims=True), EPS)
    sim = jnp.einsum("bsd,bnd->bsn", f1n, t1n)                               # (B, S, N)
    e = jnp.exp(sim)
    norm_sim = e / jnp.sum(e, axis=1, keepdims=True)
    feats1 = jnp.einsum("bsn,bsd->bnd", norm_sim, feats)                     # (B, N, D)
    combine = jnp.concatenate([feats1, text1], axis=2)                       # (B, N, 2D)
    pred = jnp.einsum("bnc,ct->bnt", combine, params["w_head"]) + params["b_head"]
    return pred, params["regress_para"]


def init_params(key):
    ks = jax.random.split(key, 6)
    return {
        "w_ext": jax.random.normal(ks[0], (F_IN, D), jnp.float32) * 0.02,
        "b_ext": jnp.zeros((1, D), jnp.float32),
        "w_lin": jax.random.normal(ks[1], (D, D), jnp.float32) * 0.02,
        "b_lin": jax.random.normal(ks[2], (1, D), jnp.float32) * 0.01,
        "w_head": jax.random.normal(ks[3], (2 * D, NUM_TASKS), jnp.float32) * 0.02,
        "b_head": jax.random.normal(ks[4], (1, NUM_TASKS), jnp.float32) * 0.01,
        "regress_para": jax.random.normal(ks[5], (NUM_TASKS,), jnp.float32) * 0.01,
    }


if __name__ == "__main__":
    key = jax.random.PRNGKey(0)
    k_fmri, k_text, k_params = jax.random.split(key, 3)

    fmri = jax.random.normal(k_fmri, (B, S, F_IN), jnp.float32)
    text = jax.random.normal(k_text, (3, N, D), jnp.float32)   # text[1] used
    params = init_params(k_params)

    # one-time precompute (amortized over all subsequent forward calls)
    prepared = prepare_params(params, text)

    pred, regress_para = combined_model_forward(fmri, prepared, params)
    pred = jax.block_until_ready(pred)
    regress_para = jax.block_until_ready(regress_para)

    ref_pred, ref_rp = reference_forward(fmri, text, params)
    assert pred.shape == (B, N, NUM_TASKS)
    assert jnp.allclose(pred, ref_pred, atol=1e-4, rtol=1e-4), "mismatch vs reference"
    assert jnp.allclose(regress_para, ref_rp)

    print("KERNEL_OK")
</pallas_src>

<mosaic_0001>
module attributes {stable_mosaic.version = 11 : i64} {
  func.func @combined_kernel(%arg0: i32, %arg1: memref<16x384xf32, #tpu.memory_space<vmem>>, %arg2: memref<512x8xf32, #tpu.memory_space<vmem>>, %arg3: memref<384x512xf32, #tpu.memory_space<vmem>>, %arg4: memref<384x512xf32, #tpu.memory_space<vmem>>, %arg5: memref<512x128xf32, #tpu.memory_space<vmem>>, %arg6: memref<8x128xf32, #tpu.memory_space<vmem>>, %arg7: memref<2x8x128xf32, #tpu.memory_space<vmem>>) attributes {dimension_semantics = [#tpu.dimension_semantics<arbitrary>], iteration_bounds = array<i64: 1>, scalar_prefetch = 0 : i64, scratch_operands = 0 : i64, tpu.core_type = #tpu.core_type<tc>, window_params = [{pipeline_mode = #tpu.pipeline_mode<synchronous>, transform_indices = @transform_0, window_bounds = array<i64: 16, 384>}, {pipeline_mode = #tpu.pipeline_mode<synchronous>, transform_indices = @transform_1, window_bounds = array<i64: 512, 8>}, {pipeline_mode = #tpu.pipeline_mode<synchronous>, transform_indices = @transform_2, window_bounds = array<i64: 384, 512>}, {pipeline_mode = #tpu.pipeline_mode<synchronous>, transform_indices = @transform_3, window_bounds = array<i64: 384, 512>}, {pipeline_mode = #tpu.pipeline_mode<synchronous>, transform_indices = @transform_4, window_bounds = array<i64: 512, 128>}, {pipeline_mode = #tpu.pipeline_mode<synchronous>, transform_indices = @transform_5, window_bounds = array<i64: 8, 128>}, {pipeline_mode = #tpu.pipeline_mode<synchronous>, transform_indices = @transform_6, window_bounds = array<i64: 2, 8, 128>}]} {
    %c0 = arith.constant 0 : index
    %c0_0 = arith.constant 0 : index
    %0 = vector.load %arg1[%c0, %c0_0] : memref<16x384xf32, #tpu.memory_space<vmem>>, vector<16x384xf32>
    %c0_1 = arith.constant 0 : index
    %c0_2 = arith.constant 0 : index
    %1 = vector.load %arg3[%c0_1, %c0_2] : memref<384x512xf32, #tpu.memory_space<vmem>>, vector<384x512xf32>
    %cst = arith.constant dense<0.000000e+00> : vector<16x512xf32>
    %2 = tpu.matmul %0, %1, %cst {dimension_numbers = #tpu.dot_dimension_numbers<[1], [0], [0], [1], [0, 0, 1, 1], [], []>} : vector<16x384xf32>, vector<384x512xf32>, vector<16x512xf32> -> vector<16x512xf32>
    %c0_3 = arith.constant 0 : index
    %c0_4 = arith.constant 0 : index
    %3 = vector.load %arg4[%c0_3, %c0_4] : memref<384x512xf32, #tpu.memory_space<vmem>>, vector<384x512xf32>
    %cst_5 = arith.constant dense<0.000000e+00> : vector<16x512xf32>
    %4 = tpu.matmul %0, %3, %cst_5 {dimension_numbers = #tpu.dot_dimension_numbers<[1], [0], [0], [1], [0, 0, 1, 1], [], []>} : vector<16x384xf32>, vector<384x512xf32>, vector<16x512xf32> -> vector<16x512xf32>
    %5 = arith.mulf %4, %4 : vector<16x512xf32>
    %cst_6 = arith.constant dense<0.000000e+00> : vector<16xf32>
    %6 = vector.multi_reduction <add>, %5, %cst_6 [1] : vector<16x512xf32> to vector<16xf32>
    %7 = vector.shape_cast %6 : vector<16xf32> to vector<16x1xf32>
    %8 = math.sqrt %7 : vector<16x1xf32>
    %cst_7 = arith.constant 9.99999993E-9 : f32
    %9 = vector.broadcast %cst_7 : f32 to vector<16x1xf32>
    %10 = arith.maximumf %8, %9 : vector<16x1xf32>
    %cst_8 = arith.constant 1.000000e+00 : f32
    %11 = vector.broadcast %cst_8 : f32 to vector<16x1xf32>
    %12 = arith.divf %11, %10 : vector<16x1xf32>
    %c0_9 = arith.constant 0 : index
    %c0_10 = arith.constant 0 : index
    %13 = vector.load %arg2[%c0_9, %c0_10] : memref<512x8xf32, #tpu.memory_space<vmem>>, vector<512x8xf32>
    %cst_11 = arith.constant dense<0.000000e+00> : vector<16x8xf32>
    %14 = tpu.matmul %4, %13, %cst_11 {dimension_numbers = #tpu.dot_dimension_numbers<[1], [0], [0], [1], [0, 0, 1, 1], [], []>} : vector<16x512xf32>, vector<512x8xf32>, vector<16x8xf32> -> vector<16x8xf32>
    %15 = vector.broadcast %12 : vector<16x1xf32> to vector<16x8xf32>
    %16 = arith.mulf %14, %15 : vector<16x8xf32>
    %17 = math.exp %16 : vector<16x8xf32>
    %c0_12 = arith.constant 0 : index
    %c0_13 = arith.constant 0 : index
    %18 = vector.load %arg5[%c0_12, %c0_13] : memref<512x128xf32, #tpu.memory_space<vmem>>, vector<512x128xf32>
    %c0_14 = arith.constant 0 : index
    %c0_15 = arith.constant 0 : index
    %19 = vector.load %arg6[%c0_14, %c0_15] : memref<8x128xf32, #tpu.memory_space<vmem>>, vector<8x128xf32>
    %20 = vector.extract_strided_slice %17 {offsets = [0, 0], sizes = [8, 8], strides = [1, 1]} : vector<16x8xf32> to vector<8x8xf32>
    %21 = vector.extract_strided_slice %2 {offsets = [0, 0], sizes = [8, 512], strides = [1, 1]} : vector<16x512xf32> to vector<8x512xf32>
    %cst_16 = arith.constant dense<0.000000e+00> : vector<8xf32>
    %22 = vector.multi_reduction <add>, %20, %cst_16 [0] : vector<8x8xf32> to vector<8xf32>
    %23 = vector.shape_cast %22 : vector<8xf32> to vector<1x8xf32>
    %cst_17 = arith.constant 1.000000e+00 : f32
    %24 = vector.broadcast %cst_17 : f32 to vector<1x8xf32>
    %25 = arith.divf %24, %23 : vector<1x8xf32>
    %26 = vector.broadcast %25 : vector<1x8xf32> to vector<8x8xf32>
    %27 = arith.mulf %20, %26 : vector<8x8xf32>
    %cst_18 = arith.constant dense<0.000000e+00> : vector<8x512xf32>
    %28 = tpu.matmul %27, %21, %cst_18 {dimension_numbers = #tpu.dot_dimension_numbers<[0], [0], [1], [1], [0, 1, 1, 1], [], []>} : vector<8x8xf32>, vector<8x512xf32>, vector<8x512xf32> -> vector<8x512xf32>
    %cst_19 = arith.constant dense<0.000000e+00> : vector<8x128xf32>
    %29 = tpu.matmul %28, %18, %cst_19 {dimension_numbers = #tpu.dot_dimension_numbers<[1], [0], [0], [1], [0, 0, 1, 1], [], []>} : vector<8x512xf32>, vector<512x128xf32>, vector<8x128xf32> -> vector<8x128xf32>
    %30 = arith.addf %29, %19 : vector<8x128xf32>
    %c0_20 = arith.constant 0 : index
    %c0_21 = arith.constant 0 : index
    %c0_22 = arith.constant 0 : index
    %31 = vector.load %arg7[%c0_20, %c0_21, %c0_22] : memref<2x8x128xf32, #tpu.memory_space<vmem>>, vector<1x8x128xf32>
    %32 = vector.shape_cast %31 : vector<1x8x128xf32> to vector<8x128xf32>
    %33 = vector.shape_cast %30 : vector<8x128xf32> to vector<1x8x128xf32>
    tpu.vector_store %arg7[%c0_20, %c0_21, %c0_22], %33 {strides = array<i32>} : memref<2x8x128xf32, #tpu.memory_space<vmem>>, vector<1x8x128xf32>,
    %34 = vector.extract_strided_slice %17 {offsets = [8, 0], sizes = [8, 8], strides = [1, 1]} : vector<16x8xf32> to vector<8x8xf32>
    %35 = vector.extract_strided_slice %2 {offsets = [8, 0], sizes = [8, 512], strides = [1, 1]} : vector<16x512xf32> to vector<8x512xf32>
    %cst_23 = arith.constant dense<0.000000e+00> : vector<8xf32>
    %36 = vector.multi_reduction <add>, %34, %cst_23 [0] : vector<8x8xf32> to vector<8xf32>
    %37 = vector.shape_cast %36 : vector<8xf32> to vector<1x8xf32>
    %cst_24 = arith.constant 1.000000e+00 : f32
    %38 = vector.broadcast %cst_24 : f32 to vector<1x8xf32>
    %39 = arith.divf %38, %37 : vector<1x8xf32>
    %40 = vector.broadcast %39 : vector<1x8xf32> to vector<8x8xf32>
    %41 = arith.mulf %34, %40 : vector<8x8xf32>
    %cst_25 = arith.constant dense<0.000000e+00> : vector<8x512xf32>
    %42 = tpu.matmul %41, %35, %cst_25 {dimension_numbers = #tpu.dot_dimension_numbers<[0], [0], [1], [1], [0, 1, 1, 1], [], []>} : vector<8x8xf32>, vector<8x512xf32>, vector<8x512xf32> -> vector<8x512xf32>
    %cst_26 = arith.constant dense<0.000000e+00> : vector<8x128xf32>
    %43 = tpu.matmul %42, %18, %cst_26 {dimension_numbers = #tpu.dot_dimension_numbers<[1], [0], [0], [1], [0, 0, 1, 1], [], []>} : vector<8x512xf32>, vector<512x128xf32>, vector<8x128xf32> -> vector<8x128xf32>
    %44 = arith.addf %43, %19 : vector<8x128xf32>
    %c1 = arith.constant 1 : index
    %c0_27 = arith.constant 0 : index
    %c0_28 = arith.constant 0 : index
    %45 = vector.load %arg7[%c1, %c0_27, %c0_28] : memref<2x8x128xf32, #tpu.memory_space<vmem>>, vector<1x8x128xf32>
    %46 = vector.shape_cast %45 : vector<1x8x128xf32> to vector<8x128xf32>
    %47 = vector.shape_cast %44 : vector<8x128xf32> to vector<1x8x128xf32>
    tpu.vector_store %arg7[%c1, %c0_27, %c0_28], %47 {strides = array<i32>} : memref<2x8x128xf32, #tpu.memory_space<vmem>>, vector<1x8x128xf32>,
    return
  }
  func.func @transform_0(%arg0: i32) -> (i32, i32) {
    %c0_i32 = arith.constant 0 : i32
    %c0_i32_0 = arith.constant 0 : i32
    %c0_i32_1 = arith.constant 0 : i32
    return %c0_i32, %c0_i32_0 : i32, i32
  }
  func.func @transform_1(%arg0: i32) -> (i32, i32) {
    %c0_i32 = arith.constant 0 : i32
    %c0_i32_0 = arith.constant 0 : i32
    %c0_i32_1 = arith.constant 0 : i32
    return %c0_i32, %c0_i32_0 : i32, i32
  }
  func.func @transform_2(%arg0: i32) -> (i32, i32) {
    %c0_i32 = arith.constant 0 : i32
    %c0_i32_0 = arith.constant 0 : i32
    %c0_i32_1 = arith.constant 0 : i32
    return %c0_i32, %c0_i32_0 : i32, i32
  }
  func.func @transform_3(%arg0: i32) -> (i32, i32) {
    %c0_i32 = arith.constant 0 : i32
    %c0_i32_0 = arith.constant 0 : i32
    %c0_i32_1 = arith.constant 0 : i32
    return %c0_i32, %c0_i32_0 : i32, i32
  }
  func.func @transform_4(%arg0: i32) -> (i32, i32) {
    %c0_i32 = arith.constant 0 : i32
    %c0_i32_0 = arith.constant 0 : i32
    %c0_i32_1 = arith.constant 0 : i32
    return %c0_i32, %c0_i32_0 : i32, i32
  }
  func.func @transform_5(%arg0: i32) -> (i32, i32) {
    %c0_i32 = arith.constant 0 : i32
    %c0_i32_0 = arith.constant 0 : i32
    %c0_i32_1 = arith.constant 0 : i32
    return %c0_i32, %c0_i32_0 : i32, i32
  }
  func.func @transform_6(%arg0: i32) -> (i32, i32, i32) {
    %c0_i32 = arith.constant 0 : i32
    %c0_i32_0 = arith.constant 0 : i32
    %c0_i32_1 = arith.constant 0 : i32
    %c0_i32_2 = arith.constant 0 : i32
    return %c0_i32, %c0_i32_0, %c0_i32_1 : i32, i32, i32
  }
}

</mosaic_0001>

<llo_original>
// kernel: _forward_pallas.1
$region0: #{_forward_pallas.1}
  #allocation0 [shape = 'u32[]', space=smem, size = 0x4, offset = 0x4, fixed_abs, tag = 'smem constant byte address 0x4 - core index']
  #allocation1 [shape = 'u32[72,128]{1,0:T(1,128)}', space=vmem, size = 0x9000, scoped, tag = 'internal scratch']
  %s0 = inlined_call_operand.vmem [shape: f32[16,384], index: 0, kind: input, shape index: {}]
  %s1 = inlined_call_operand.vmem [shape: f32[512,8], index: 1, kind: input, shape index: {}]
  %s2 = inlined_call_operand.hbm [shape: f32[384,512], index: 2, kind: input, shape index: {}]
  %s3 = inlined_call_operand.hbm [shape: f32[384,512], index: 3, kind: input, shape index: {}]
  %s4 = inlined_call_operand.vmem [shape: f32[512,128], index: 4, kind: input, shape index: {}]
  %s5 = inlined_call_operand.vmem [shape: f32[8,128], index: 5, kind: input, shape index: {}]
  %s6 = inlined_call_operand.hbm [shape: f32[2,8,128], index: 6, kind: output, shape index: {}]
  %s7 = sld [smem:[#allocation0]]
  $region42: #{_forward_pallas.1} parent=0
    _
  %s9 = ssub.s32 1, %s7
  %s10 = scalar_select 0, %s9, %s7
  $region1: #{_forward_pallas.1} parent=0
    #allocation2 [shape = 'u8[786432]{0}', space=vmem, size = 0xc0000, scoped, tag = 'input window, operand 2, single buffered']
    #allocation3 [shape = 's32[1]{0}', space=sflag, size = 0x4, scoped, tag = 'scoped memory for _forward_pallas.1']
    #allocation4 [shape = 's32[1]{0}', space=sflag, size = 0x4, scoped, tag = 'scoped memory for _forward_pallas.1']
    #allocation5 [shape = 'u8[786432]{0}', space=vmem, size = 0xc0000, scoped, tag = 'input window, operand 3, single buffered']
    #allocation6 [shape = 's32[1]{0}', space=sflag, size = 0x4, scoped, tag = 'scoped memory for _forward_pallas.1']
    #allocation7 [shape = 'u8[8192]{0}', space=vmem, size = 0x2000, scoped, tag = 'output window, operand 0, single buffered']
    %11 = vsyncpa [#allocation3], 0
    %12 = vsyncpa [#allocation6], 0
    %13 = vsyncpa [#allocation4], 0
    // Predicated region
    $region2: #{_forward_pallas.1} parent=1 // pred_check
      _
    $region3: #{_forward_pallas.1} parent=1 // pred_check_branch
      %15 = sbr.rel (0) target = $region5
    $region4: #{_forward_pallas.1} parent=1 // pred_region
      _
    $region5: #{_forward_pallas.1} parent=1 // pred_fallthru
      _
    // Predicated region
    $region6: #{_forward_pallas.1} parent=1 // pred_check
      _
    $region7: #{_forward_pallas.1} parent=1 // pred_check_branch
      %17 = sbr.rel (0) target = $region9
    $region8: #{_forward_pallas.1} parent=1 // pred_region
      _
    $region9: #{_forward_pallas.1} parent=1 // pred_fallthru
      _
    // Predicated region
    $region10: #{_forward_pallas.1} parent=1 // pred_check
      _
    $region11: #{_forward_pallas.1} parent=1 // pred_check_branch
      %19 = sbr.rel (0) target = $region13
    $region12: #{_forward_pallas.1} parent=1 // pred_region
      %21 = vsyncadd [#allocation3], 0
      %s22 = sshll.u32 %s2, 4
      %s23 = int_to_ptr.hbm [resolvable:$true] %s22
      %s24 = sshll.u32 [#allocation2], 4
      %s25 = int_to_ptr.vmem [resolvable:$true] %s24
      %30 = dma.hbm_to_vmem [thread:$0]  %s23, 24576, %s25, [#allocation3], 512, 512, 32
    $region13: #{_forward_pallas.1} parent=1 // pred_fallthru
      _
    // Predicated region
    $region14: #{_forward_pallas.1} parent=1 // pred_check
      _
    $region15: #{_forward_pallas.1} parent=1 // pred_check_branch
      %32 = sbr.rel (0) target = $region17
    $region16: #{_forward_pallas.1} parent=1 // pred_region
      %34 = vsyncadd [#allocation6], 0
      %s35 = sshll.u32 %s3, 4
      %s36 = int_to_ptr.hbm [resolvable:$true] %s35
      %s37 = sshll.u32 [#allocation5], 4
      %s38 = int_to_ptr.vmem [resolvable:$true] %s37
      %43 = dma.hbm_to_vmem [thread:$0]  %s36, 24576, %s38, [#allocation6], 512, 512, 32
    $region17: #{_forward_pallas.1} parent=1 // pred_fallthru
      _
    // Predicated region
    $region18: #{_forward_pallas.1} parent=1 // pred_check
      _
    $region19: #{_forward_pallas.1} parent=1 // pred_check_branch
      %45 = sbr.rel (0) target = $region21
    $region20: #{_forward_pallas.1} parent=1 // pred_region
      _
    $region21: #{_forward_pallas.1} parent=1 // pred_fallthru
      _
    // Predicated region
    $region22: #{_forward_pallas.1} parent=1 // pred_check
      _
    $region23: #{_forward_pallas.1} parent=1 // pred_check_branch
      %47 = sbr.rel (0) target = $region25
    $region24: #{_forward_pallas.1} parent=1 // pred_region
      _
    $region25: #{_forward_pallas.1} parent=1 // pred_fallthru
      _
    // Predicated region
    $region26: #{_forward_pallas.1} parent=1 // pred_check
      _
    $region27: #{_forward_pallas.1} parent=1 // pred_check_branch
      %49 = sbr.rel (0) target = $region29
    $region28: #{_forward_pallas.1} parent=1 // pred_region
      %51 = dma.done [#allocation3], 24576
    $region29: #{_forward_pallas.1} parent=1 // pred_fallthru
      _
    // Predicated region
    $region30: #{_forward_pallas.1} parent=1 // pred_check
      _
    $region31: #{_forward_pallas.1} parent=1 // pred_check_branch
      %53 = sbr.rel (0) target = $region33
    $region32: #{_forward_pallas.1} parent=1 // pred_region
      %55 = dma.done [#allocation6], 24576
    $region33: #{_forward_pallas.1} parent=1 // pred_fallthru
      _
    %v56 = vld [vmem:[%s0] sm:$0xff]
    %v57 = vld [vmem:[%s0 + $0x8] sm:$0xff]
    %v58 = vld [vmem:[%s0 + $0x10] sm:$0xff]
    %v59 = vld [vmem:[%s0 + $0x18] sm:$0xff]
    %v60 = vld [vmem:[%s0 + $0x20] sm:$0xff]
    %v61 = vld [vmem:[%s0 + $0x28] sm:$0xff]
    %v62 = vld [vmem:[#allocation2] sm:$0xff]
    %v63 = vld [vmem:[#allocation2 + $0x8] sm:$0xff]
    %v64 = vld [vmem:[#allocation2 + $0x10] sm:$0xff]
    %v65 = vld [vmem:[#allocation2 + $0x18] sm:$0xff]
    %v66 = vld [vmem:[#allocation2 + $0x20] sm:$0xff]
    %v67 = vld [vmem:[#allocation2 + $0x28] sm:$0xff]
    %v68 = vld [vmem:[#allocation2 + $0x30] sm:$0xff]
    %v69 = vld [vmem:[#allocation2 + $0x38] sm:$0xff]
    %v70 = vld [vmem:[#allocation2 + $0x40] sm:$0xff]
    %v71 = vld [vmem:[#allocation2 + $0x48] sm:$0xff]
    %v72 = vld [vmem:[#allocation2 + $0x50] sm:$0xff]
    %v73 = vld [vmem:[#allocation2 + $0x58] sm:$0xff]
    %v74 = vld [vmem:[#allocation2 + $0x60] sm:$0xff]
    %v75 = vld [vmem:[#allocation2 + $0x68] sm:$0xff]
    %v76 = vld [vmem:[#allocation2 + $0x70] sm:$0xff]
    %v77 = vld [vmem:[#allocation2 + $0x78] sm:$0xff]
    %v78 = vld [vmem:[#allocation2 + $0x80] sm:$0xff]
    %v79 = vld [vmem:[#allocation2 + $0x88] sm:$0xff]
    %v80 = vld [vmem:[#allocation2 + $0x90] sm:$0xff]
    %v81 = vld [vmem:[#allocation2 + $0x98] sm:$0xff]
    %v82 = vld [vmem:[#allocation2 + $0xa0] sm:$0xff]
    %v83 = vld [vmem:[#allocation2 + $0xa8] sm:$0xff]
    %v84 = vld [vmem:[#allocation2 + $0xb0] sm:$0xff]
    %v85 = vld [vmem:[#allocation2 + $0xb8] sm:$0xff]
    %v86 = vld [vmem:[#allocation2 + $0xc0] sm:$0xff]
    %v87 = vld [vmem:[#allocation2 + $0xc8] sm:$0xff]
    %v88 = vld [vmem:[#allocation2 + $0xd0] sm:$0xff]
    %v89 = vld [vmem:[#allocation2 + $0xd8] sm:$0xff]
    %v90 = vld [vmem:[#allocation2 + $0xe0] sm:$0xff]
    %v91 = vld [vmem:[#allocation2 + $0xe8] sm:$0xff]
    %v92 = vld [vmem:[#allocation2 + $0xf0] sm:$0xff]
    %v93 = vld [vmem:[#allocation2 + $0xf8] sm:$0xff]
    %v94 = vld [vmem:[#allocation2 + $0x100] sm:$0xff]
    %v95 = vld [vmem:[#allocation2 + $0x108] sm:$0xff]
    %v96 = vld [vmem:[#allocation2 + $0x110] sm:$0xff]
    %v97 = vld [vmem:[#allocation2 + $0x118] sm:$0xff]
    %v98 = vld [vmem:[#allocation2 + $0x120] sm:$0xff]
    %v99 = vld [vmem:[#allocation2 + $0x128] sm:$0xff]
    %v100 = vld [vmem:[#allocation2 + $0x130] sm:$0xff]
    %v101 = vld [vmem:[#allocation2 + $0x138] sm:$0xff]
    %v102 = vld [vmem:[#allocation2 + $0x140] sm:$0xff]
    %v103 = vld [vmem:[#allocation2 + $0x148] sm:$0xff]
    %v104 = vld [vmem:[#allocation2 + $0x150] sm:$0xff]
    %v105 = vld [vmem:[#allocation2 + $0x158] sm:$0xff]
    %v106 = vld [vmem:[#allocation2 + $0x160] sm:$0xff]
    %v107 = vld [vmem:[#allocation2 + $0x168] sm:$0xff]
    %v108 = vld [vmem:[#allocation2 + $0x170] sm:$0xff]
    %v109 = vld [vmem:[#allocation2 + $0x178] sm:$0xff]
    %v110 = vld [vmem:[#allocation2 + $0x180] sm:$0xff]
    %v111 = vld [vmem:[#allocation2 + $0x188] sm:$0xff]
    %v112 = vld [vmem:[#allocation2 + $0x190] sm:$0xff]
    %v113 = vld [vmem:[#allocation2 + $0x198] sm:$0xff]
    %v114 = vld [vmem:[#allocation2 + $0x1a0] sm:$0xff]
    %v115 = vld [vmem:[#allocation2 + $0x1a8] sm:$0xff]
    %v116 = vld [vmem:[#allocation2 + $0x1b0] sm:$0xff]
    %v117 = vld [vmem:[#allocation2 + $0x1b8] sm:$0xff]
    %v118 = vld [vmem:[#allocation2 + $0x1c0] sm:$0xff]
    %v119 = vld [vmem:[#allocation2 + $0x1c8] sm:$0xff]
    %v120 = vld [vmem:[#allocation2 + $0x1d0] sm:$0xff]
    %v121 = vld [vmem:[#allocation2 + $0x1d8] sm:$0xff]
    %v122 = vld [vmem:[#allocation2 + $0x1e0] sm:$0xff]
    %v123 = vld [vmem:[#allocation2 + $0x1e8] sm:$0xff]
    %v124 = vld [vmem:[#allocation2 + $0x1f0] sm:$0xff]
    %v125 = vld [vmem:[#allocation2 + $0x1f8] sm:$0xff]
    %v126 = vld [vmem:[#allocation2 + $0x200] sm:$0xff]
    %v127 = vld [vmem:[#allocation2 + $0x208] sm:$0xff]
    %v128 = vld [vmem:[#allocation2 + $0x210] sm:$0xff]
    %v129 = vld [vmem:[#allocation2 + $0x218] sm:$0xff]
    %v130 = vld [vmem:[#allocation2 + $0x220] sm:$0xff]
    %v131 = vld [vmem:[#allocation2 + $0x228] sm:$0xff]
    %v132 = vld [vmem:[#allocation2 + $0x230] sm:$0xff]
    %v133 = vld [vmem:[#allocation2 + $0x238] sm:$0xff]
    %v134 = vld [vmem:[#allocation2 + $0x240] sm:$0xff]
    %v135 = vld [vmem:[#allocation2 + $0x248] sm:$0xff]
    %v136 = vld [vmem:[#allocation2 + $0x250] sm:$0xff]
    %v137 = vld [vmem:[#allocation2 + $0x258] sm:$0xff]
    %v138 = vld [vmem:[#allocation2 + $0x260] sm:$0xff]
    %v139 = vld [vmem:[#allocation2 + $0x268] sm:$0xff]
    %v140 = vld [vmem:[#allocation2 + $0x270] sm:$0xff]
    %v141 = vld [vmem:[#allocation2 + $0x278] sm:$0xff]
    %v142 = vld [vmem:[#allocation2 + $0x280] sm:$0xff]
    %v143 = vld [vmem:[#allocation2 + $0x288] sm:$0xff]
    %v144 = vld [vmem:[#allocation2 + $0x290] sm:$0xff]
    %v145 = vld [vmem:[#allocation2 + $0x298] sm:$0xff]
    %v146 = vld [vmem:[#allocation2 + $0x2a0] sm:$0xff]
    %v147 = vld [vmem:[#allocation2 + $0x2a8] sm:$0xff]
    %v148 = vld [vmem:[#allocation2 + $0x2b0] sm:$0xff]
    %v149 = vld [vmem:[#allocation2 + $0x2b8] sm:$0xff]
    %v150 = vld [vmem:[#allocation2 + $0x2c0] sm:$0xff]
    %v151 = vld [vmem:[#allocation2 + $0x2c8] sm:$0xff]
    %v152 = vld [vmem:[#allocation2 + $0x2d0] sm:$0xff]
    %v153 = vld [vmem:[#allocation2 + $0x2d8] sm:$0xff]
    %v154 = vld [vmem:[#allocation2 + $0x2e0] sm:$0xff]
    %v155 = vld [vmem:[#allocation2 + $0x2e8] sm:$0xff]
    %v156 = vld [vmem:[#allocation2 + $0x2f0] sm:$0xff]
    %v157 = vld [vmem:[#allocation2 + $0x2f8] sm:$0xff]
    %v158 = vld [vmem:[#allocation2 + $0x300] sm:$0xff]
    %v159 = vld [vmem:[#allocation2 + $0x308] sm:$0xff]
    %v160 = vld [vmem:[#allocation2 + $0x310] sm:$0xff]
    %v161 = vld [vmem:[#allocation2 + $0x318] sm:$0xff]
    %v162 = vld [vmem:[#allocation2 + $0x320] sm:$0xff]
    %v163 = vld [vmem:[#allocation2 + $0x328] sm:$0xff]
    %v164 = vld [vmem:[#allocation2 + $0x330] sm:$0xff]
    %v165 = vld [vmem:[#allocation2 + $0x338] sm:$0xff]
    %v166 = vld [vmem:[#allocation2 + $0x340] sm:$0xff]
    %v167 = vld [vmem:[#allocation2 + $0x348] sm:$0xff]
    %v168 = vld [vmem:[#allocation2 + $0x350] sm:$0xff]
    %v169 = vld [vmem:[#allocation2 + $0x358] sm:$0xff]
    %v170 = vld [vmem:[#allocation2 + $0x360] sm:$0xff]
    %v171 = vld [vmem:[#allocation2 + $0x368] sm:$0xff]
    %v172 = vld [vmem:[#allocation2 + $0x370] sm:$0xff]
    %v173 = vld [vmem:[#allocation2 + $0x378] sm:$0xff]
    %v174 = vld [vmem:[#allocation2 + $0x380] sm:$0xff]
    %v175 = vld [vmem:[#allocation2 + $0x388] sm:$0xff]
    %v176 = vld [vmem:[#allocation2 + $0x390] sm:$0xff]
    %v177 = vld [vmem:[#allocation2 + $0x398] sm:$0xff]
    %v178 = vld [vmem:[#allocation2 + $0x3a0] sm:$0xff]
    %v179 = vld [vmem:[#allocation2 + $0x3a8] sm:$0xff]
    %v180 = vld [vmem:[#allocation2 + $0x3b0] sm:$0xff]
    %v181 = vld [vmem:[#allocation2 + $0x3b8] sm:$0xff]
    %v182 = vld [vmem:[#allocation2 + $0x3c0] sm:$0xff]
    %v183 = vld [vmem:[#allocation2 + $0x3c8] sm:$0xff]
    %v184 = vld [vmem:[#allocation2 + $0x3d0] sm:$0xff]
    %v185 = vld [vmem:[#allocation2 + $0x3d8] sm:$0xff]
    %v186 = vld [vmem:[#allocation2 + $0x3e0] sm:$0xff]
    %v187 = vld [vmem:[#allocation2 + $0x3e8] sm:$0xff]
    %v188 = vld [vmem:[#allocation2 + $0x3f0] sm:$0xff]
    %v189 = vld [vmem:[#allocation2 + $0x3f8] sm:$0xff]
    %v190 = vld [vmem:[#allocation2 + $0x400] sm:$0xff]
    %v191 = vld [vmem:[#allocation2 + $0x408] sm:$0xff]
    %v192 = vld [vmem:[#allocation2 + $0x410] sm:$0xff]
    %v193 = vld [vmem:[#allocation2 + $0x418] sm:$0xff]
    %v194 = vld [vmem:[#allocation2 + $0x420] sm:$0xff]
    %v195 = vld [vmem:[#allocation2 + $0x428] sm:$0xff]
    %v196 = vld [vmem:[#allocation2 + $0x430] sm:$0xff]
    %v197 = vld [vmem:[#allocation2 + $0x438] sm:$0xff]
    %v198 = vld [vmem:[#allocation2 + $0x440] sm:$0xff]
    %v199 = vld [vmem:[#allocation2 + $0x448] sm:$0xff]
    %v200 = vld [vmem:[#allocation2 + $0x450] sm:$0xff]
    %v201 = vld [vmem:[#allocation2 + $0x458] sm:$0xff]
    %v202 = vld [vmem:[#allocation2 + $0x460] sm:$0xff]
    %v203 = vld [vmem:[#allocation2 + $0x468] sm:$0xff]
    %v204 = vld [vmem:[#allocation2 + $0x470] sm:$0xff]
    %v205 = vld [vmem:[#allocation2 + $0x478] sm:$0xff]
    %v206 = vld [vmem:[#allocation2 + $0x480] sm:$0xff]
    %v207 = vld [vmem:[#allocation2 + $0x488] sm:$0xff]
    %v208 = vld [vmem:[#allocation2 + $0x490] sm:$0xff]
    %v209 = vld [vmem:[#allocation2 + $0x498] sm:$0xff]
    %v210 = vld [vmem:[#allocation2 + $0x4a0] sm:$0xff]
    %v211 = vld [vmem:[#allocation2 + $0x4a8] sm:$0xff]
    %v212 = vld [vmem:[#allocation2 + $0x4b0] sm:$0xff]
    %v213 = vld [vmem:[#allocation2 + $0x4b8] sm:$0xff]
    %v214 = vld [vmem:[#allocation2 + $0x4c0] sm:$0xff]
    %v215 = vld [vmem:[#allocation2 + $0x4c8] sm:$0xff]
    %v216 = vld [vmem:[#allocation2 + $0x4d0] sm:$0xff]
    %v217 = vld [vmem:[#allocation2 + $0x4d8] sm:$0xff]
    %v218 = vld [vmem:[#allocation2 + $0x4e0] sm:$0xff]
    %v219 = vld [vmem:[#allocation2 + $0x4e8] sm:$0xff]
    %v220 = vld [vmem:[#allocation2 + $0x4f0] sm:$0xff]
    %v221 = vld [vmem:[#allocation2 + $0x4f8] sm:$0xff]
    %v222 = vld [vmem:[#allocation2 + $0x500] sm:$0xff]
    %v223 = vld [vmem:[#allocation2 + $0x508] sm:$0xff]
    %v224 = vld [vmem:[#allocation2 + $0x510] sm:$0xff]
    %v225 = vld [vmem:[#allocation2 + $0x518] sm:$0xff]
    %v226 = vld [vmem:[#allocation2 + $0x520] sm:$0xff]
    %v227 = vld [vmem:[#allocation2 + $0x528] sm:$0xff]
    %v228 = vld [vmem:[#allocation2 + $0x530] sm:$0xff]
    %v229 = vld [vmem:[#allocation2 + $0x538] sm:$0xff]
    %v230 = vld [vmem:[#allocation2 + $0x540] sm:$0xff]
    %v231 = vld [vmem:[#allocation2 + $0x548] sm:$0xff]
    %v232 = vld [vmem:[#allocation2 + $0x550] sm:$0xff]
    %v233 = vld [vmem:[#allocation2 + $0x558] sm:$0xff]
    %v234 = vld [vmem:[#allocation2 + $0x560] sm:$0xff]
    %v235 = vld [vmem:[#allocation2 + $0x568] sm:$0xff]
    %v236 = vld [vmem:[#allocation2 + $0x570] sm:$0xff]
    %v237 = vld [vmem:[#allocation2 + $0x578] sm:$0xff]
    %v238 = vld [vmem:[#allocation2 + $0x580] sm:$0xff]
    %v239 = vld [vmem:[#allocation2 + $0x588] sm:$0xff]
    %v240 = vld [vmem:[#allocation2 + $0x590] sm:$0xff]
    %v241 = vld [vmem:[#allocation2 + $0x598] sm:$0xff]
    %v242 = vld [vmem:[#allocation2 + $0x5a0] sm:$0xff]
    %v243 = vld [vmem:[#allocation2 + $0x5a8] sm:$0xff]
    %v244 = vld [vmem:[#allocation2 + $0x5b0] sm:$0xff]
    %v245 = vld [vmem:[#allocation2 + $0x5b8] sm:$0xff]
    %v246 = vld [vmem:[#allocation2 + $0x5c0] sm:$0xff]
    %v247 = vld [vmem:[#allocation2 + $0x5c8] sm:$0xff]
    %v248 = vld [vmem:[#allocation2 + $0x5d0] sm:$0xff]
    %v249 = vld [vmem:[#allocation2 + $0x5d8] sm:$0xff]
    %v250 = vld [vmem:[#allocation2 + $0x5e0] sm:$0xff]
    %v251 = vld [vmem:[#allocation2 + $0x5e8] sm:$0xff]
    %v252 = vld [vmem:[#allocation2 + $0x5f0] sm:$0xff]
    %v253 = vld [vmem:[#allocation2 + $0x5f8] sm:$0xff]
    %254 = vmatpush.msra.mxu0 %v122
    %255 = vmatpush.msra.mxu0 %v118
    %256 = vmatpush.msra.mxu0 %v114
    %257 = vmatpush.msra.mxu0 %v110
    %258 = vmatpush.msra.mxu0 %v106
    %259 = vmatpush.msra.mxu0 %v102
    %260 = vmatpush.msra.mxu0 %v98
    %261 = vmatpush.msra.mxu0 %v94
    %262 = vmatpush.msra.mxu0 %v90
    %263 = vmatpush.msra.mxu0 %v86
    %264 = vmatpush.msra.mxu0 %v82
    %265 = vmatpush.msra.mxu0 %v78
    %266 = vmatpush.msra.mxu0 %v74
    %267 = vmatpush.msra.mxu0 %v70
    %268 = vmatpush.msra.mxu0 %v66
    %269 = vmatpush.msra.mxu0 %v62
    %270 = vmatmul.f32.gmra.mxu0 %v56
    %v271 = vpop.f32.mrf.mxu0
    %v272 = vadd.f32 0.0, %v271
    %273 = vmatmul.f32.gmra.mxu0 %v59
    %v274 = vpop.f32.mrf.mxu0
    %v275 = vadd.f32 0.0, %v274
    %276 = vdwg.mxu0
    %277 = vmatpush.msra.mxu0 %v186
    %278 = vmatpush.msra.mxu0 %v182
    %279 = vmatpush.msra.mxu0 %v178
    %280 = vmatpush.msra.mxu0 %v174
    %281 = vmatpush.msra.mxu0 %v170
    %282 = vmatpush.msra.mxu0 %v166
    %283 = vmatpush.msra.mxu0 %v162
    %284 = vmatpush.msra.mxu0 %v158
    %285 = vmatpush.msra.mxu0 %v154
    %286 = vmatpush.msra.mxu0 %v150
    %287 = vmatpush.msra.mxu0 %v146
    %288 = vmatpush.msra.mxu0 %v142
    %289 = vmatpush.msra.mxu0 %v138
    %290 = vmatpush.msra.mxu0 %v134
    %291 = vmatpush.msra.mxu0 %v130
    %292 = vmatpush.msra.mxu0 %v126
    %293 = vmatmul.f32.gmra.mxu0 %v57
    %v294 = vpop.f32.mrf.mxu0
    %v295 = vadd.f32 %v272, %v294
    %296 = vmatmul.f32.gmra.mxu0 %v60
    %v297 = vpop.f32.mrf.mxu0
    %v298 = vadd.f32 %v275, %v297
    %299 = vdwg.mxu0
    %300 = vmatpush.msra.mxu0 %v250
    %301 = vmatpush.msra.mxu0 %v246
    %302 = vmatpush.msra.mxu0 %v242
    %303 = vmatpush.msra.mxu0 %v238
    %304 = vmatpush.msra.mxu0 %v234
    %305 = vmatpush.msra.mxu0 %v230
    %306 = vmatpush.msra.mxu0 %v226
    %307 = vmatpush.msra.mxu0 %v222
    %308 = vmatpush.msra.mxu0 %v218
    %309 = vmatpush.msra.mxu0 %v214
    %310 = vmatpush.msra.mxu0 %v210
    %311 = vmatpush.msra.mxu0 %v206
    %312 = vmatpush.msra.mxu0 %v202
    %313 = vmatpush.msra.mxu0 %v198
    %314 = vmatpush.msra.mxu0 %v194
    %315 = vmatpush.msra.mxu0 %v190
    %316 = vmatmul.f32.gmra.mxu0 %v58
    %v317 = vpop.f32.mrf.mxu0
    %v318 = vadd.f32 %v295, %v317
    %319 = vmatmul.f32.gmra.mxu0 %v61
    %v320 = vpop.f32.mrf.mxu0
    %v321 = vadd.f32 %v298, %v320
    %322 = vdwg.mxu0
    %323 = vmatpush.msra.mxu0 %v123
    %324 = vmatpush.msra.mxu0 %v119
    %325 = vmatpush.msra.mxu0 %v115
    %326 = vmatpush.msra.mxu0 %v111
    %327 = vmatpush.msra.mxu0 %v107
    %328 = vmatpush.msra.mxu0 %v103
    %329 = vmatpush.msra.mxu0 %v99
    %330 = vmatpush.msra.mxu0 %v95
    %331 = vmatpush.msra.mxu0 %v91
    %332 = vmatpush.msra.mxu0 %v87
    %333 = vmatpush.msra.mxu0 %v83
    %334 = vmatpush.msra.mxu0 %v79
    %335 = vmatpush.msra.mxu0 %v75
    %336 = vmatpush.msra.mxu0 %v71
    %337 = vmatpush.msra.mxu0 %v67
    %338 = vmatpush.msra.mxu0 %v63
    %339 = vmatmul.f32.gmra.mxu0 %v56
    %v340 = vpop.f32.mrf.mxu0
    %v341 = vadd.f32 0.0, %v340
    %342 = vmatmul.f32.gmra.mxu0 %v59
    %v343 = vpop.f32.mrf.mxu0
    %v344 = vadd.f32 0.0, %v343
    %345 = vdwg.mxu0
    %346 = vmatpush.msra.mxu0 %v187
    %347 = vmatpush.msra.mxu0 %v183
    %348 = vmatpush.msra.mxu0 %v179
    %349 = vmatpush.msra.mxu0 %v175
    %350 = vmatpush.msra.mxu0 %v171
    %351 = vmatpush.msra.mxu0 %v167
    %352 = vmatpush.msra.mxu0 %v163
    %353 = vmatpush.msra.mxu0 %v159
    %354 = vmatpush.msra.mxu0 %v155
    %355 = vmatpush.msra.mxu0 %v151
    %356 = vmatpush.msra.mxu0 %v147
    %357 = vmatpush.msra.mxu0 %v143
    %358 = vmatpush.msra.mxu0 %v139
    %359 = vmatpush.msra.mxu0 %v135
    %360 = vmatpush.msra.mxu0 %v131
    %361 = vmatpush.msra.mxu0 %v127
    %362 = vmatmul.f32.gmra.mxu0 %v57
    %v363 = vpop.f32.mrf.mxu0
    %v364 = vadd.f32 %v341, %v363
    %365 = vmatmul.f32.gmra.mxu0 %v60
    %v366 = vpop.f32.mrf.mxu0
    %v367 = vadd.f32 %v344, %v366
    %368 = vdwg.mxu0
    %369 = vmatpush.msra.mxu0 %v251
    %370 = vmatpush.msra.mxu0 %v247
    %371 = vmatpush.msra.mxu0 %v243
    %372 = vmatpush.msra.mxu0 %v239
    %373 = vmatpush.msra.mxu0 %v235
    %374 = vmatpush.msra.mxu0 %v231
    %375 = vmatpush.msra.mxu0 %v227
    %376 = vmatpush.msra.mxu0 %v223
    %377 = vmatpush.msra.mxu0 %v219
    %378 = vmatpush.msra.mxu0 %v215
    %379 = vmatpush.msra.mxu0 %v211
    %380 = vmatpush.msra.mxu0 %v207
    %381 = vmatpush.msra.mxu0 %v203
    %382 = vmatpush.msra.mxu0 %v199
    %383 = vmatpush.msra.mxu0 %v195
    %384 = vmatpush.msra.mxu0 %v191
    %385 = vmatmul.f32.gmra.mxu0 %v58
    %v386 = vpop.f32.mrf.mxu0
    %v387 = vadd.f32 %v364, %v386
    %388 = vmatmul.f32.gmra.mxu0 %v61
    %v389 = vpop.f32.mrf.mxu0
    %v390 = vadd.f32 %v367, %v389
    %391 = vdwg.mxu0
    %392 = vmatpush.msra.mxu0 %v124
    %393 = vmatpush.msra.mxu0 %v120
    %394 = vmatpush.msra.mxu0 %v116
    %395 = vmatpush.msra.mxu0 %v112
    %396 = vmatpush.msra.mxu0 %v108
    %397 = vmatpush.msra.mxu0 %v104
    %398 = vmatpush.msra.mxu0 %v100
    %399 = vmatpush.msra.mxu0 %v96
    %400 = vmatpush.msra.mxu0 %v92
    %401 = vmatpush.msra.mxu0 %v88
    %402 = vmatpush.msra.mxu0 %v84
    %403 = vmatpush.msra.mxu0 %v80
    %404 = vmatpush.msra.mxu0 %v76
    %405 = vmatpush.msra.mxu0 %v72
    %406 = vmatpush.msra.mxu0 %v68
    %407 = vmatpush.msra.mxu0 %v64
    %408 = vmatmul.f32.gmra.mxu0 %v56
    %v409 = vpop.f32.mrf.mxu0
    %v410 = vadd.f32 0.0, %v409
    %411 = vmatmul.f32.gmra.mxu0 %v59
    %v412 = vpop.f32.mrf.mxu0
    %v413 = vadd.f32 0.0, %v412
    %414 = vdwg.mxu0
    %415 = vmatpush.msra.mxu0 %v188
    %416 = vmatpush.msra.mxu0 %v184
    %417 = vmatpush.msra.mxu0 %v180
    %418 = vmatpush.msra.mxu0 %v176
    %419 = vmatpush.msra.mxu0 %v172
    %420 = vmatpush.msra.mxu0 %v168
    %421 = vmatpush.msra.mxu0 %v164
    %422 = vmatpush.msra.mxu0 %v160
    %423 = vmatpush.msra.mxu0 %v156
    %424 = vmatpush.msra.mxu0 %v152
    %425 = vmatpush.msra.mxu0 %v148
    %426 = vmatpush.msra.mxu0 %v144
    %427 = vmatpush.msra.mxu0 %v140
    %428 = vmatpush.msra.mxu0 %v136
    %429 = vmatpush.msra.mxu0 %v132
    %430 = vmatpush.msra.mxu0 %v128
    %431 = vmatmul.f32.gmra.mxu0 %v57
    %v432 = vpop.f32.mrf.mxu0
    %v433 = vadd.f32 %v410, %v432
    %434 = vmatmul.f32.gmra.mxu0 %v60
    %v435 = vpop.f32.mrf.mxu0
    %v436 = vadd.f32 %v413, %v435
    %437 = vdwg.mxu0
    %438 = vmatpush.msra.mxu0 %v252
    %439 = vmatpush.msra.mxu0 %v248
    %440 = vmatpush.msra.mxu0 %v244
    %441 = vmatpush.msra.mxu0 %v240
    %442 = vmatpush.msra.mxu0 %v236
    %443 = vmatpush.msra.mxu0 %v232
    %444 = vmatpush.msra.mxu0 %v228
    %445 = vmatpush.msra.mxu0 %v224
    %446 = vmatpush.msra.mxu0 %v220
    %447 = vmatpush.msra.mxu0 %v216
    %448 = vmatpush.msra.mxu0 %v212
    %449 = vmatpush.msra.mxu0 %v208
    %450 = vmatpush.msra.mxu0 %v204
    %451 = vmatpush.msra.mxu0 %v200
    %452 = vmatpush.msra.mxu0 %v196
    %453 = vmatpush.msra.mxu0 %v192
    %454 = vmatmul.f32.gmra.mxu0 %v58
    %v455 = vpop.f32.mrf.mxu0
    %v456 = vadd.f32 %v433, %v455
    %457 = vmatmul.f32.gmra.mxu0 %v61
    %v458 = vpop.f32.mrf.mxu0
    %v459 = vadd.f32 %v436, %v458
    %460 = vdwg.mxu0
    %461 = vmatpush.msra.mxu0 %v125
    %462 = vmatpush.msra.mxu0 %v121
    %463 = vmatpush.msra.mxu0 %v117
    %464 = vmatpush.msra.mxu0 %v113
    %465 = vmatpush.msra.mxu0 %v109
    %466 = vmatpush.msra.mxu0 %v105
    %467 = vmatpush.msra.mxu0 %v101
    %468 = vmatpush.msra.mxu0 %v97
    %469 = vmatpush.msra.mxu0 %v93
    %470 = vmatpush.msra.mxu0 %v89
    %471 = vmatpush.msra.mxu0 %v85
    %472 = vmatpush.msra.mxu0 %v81
    %473 = vmatpush.msra.mxu0 %v77
    %474 = vmatpush.msra.mxu0 %v73
    %475 = vmatpush.msra.mxu0 %v69
    %476 = vmatpush.msra.mxu0 %v65
    %477 = vmatmul.f32.gmra.mxu0 %v56
    %v478 = vpop.f32.mrf.mxu0
    %v479 = vadd.f32 0.0, %v478
    %480 = vmatmul.f32.gmra.mxu0 %v59
    %v481 = vpop.f32.mrf.mxu0
    %v482 = vadd.f32 0.0, %v481
    %483 = vdwg.mxu0
    %484 = vmatpush.msra.mxu0 %v189
    %485 = vmatpush.msra.mxu0 %v185
    %486 = vmatpush.msra.mxu0 %v181
    %487 = vmatpush.msra.mxu0 %v177
    %488 = vmatpush.msra.mxu0 %v173
    %489 = vmatpush.msra.mxu0 %v169
    %490 = vmatpush.msra.mxu0 %v165
    %491 = vmatpush.msra.mxu0 %v161
    %492 = vmatpush.msra.mxu0 %v157
    %493 = vmatpush.msra.mxu0 %v153
    %494 = vmatpush.msra.mxu0 %v149
    %495 = vmatpush.msra.mxu0 %v145
    %496 = vmatpush.msra.mxu0 %v141
    %497 = vmatpush.msra.mxu0 %v137
    %498 = vmatpush.msra.mxu0 %v133
    %499 = vmatpush.msra.mxu0 %v129
    %500 = vmatmul.f32.gmra.mxu0 %v57
    %v501 = vpop.f32.mrf.mxu0
    %v502 = vadd.f32 %v479, %v501
    %503 = vmatmul.f32.gmra.mxu0 %v60
    %v504 = vpop.f32.mrf.mxu0
    %v505 = vadd.f32 %v482, %v504
    %506 = vdwg.mxu0
    %507 = vmatpush.msra.mxu0 %v253
    %508 = vmatpush.msra.mxu0 %v249
    %509 = vmatpush.msra.mxu0 %v245
    %510 = vmatpush.msra.mxu0 %v241
    %511 = vmatpush.msra.mxu0 %v237
    %512 = vmatpush.msra.mxu0 %v233
    %513 = vmatpush.msra.mxu0 %v229
    %514 = vmatpush.msra.mxu0 %v225
    %515 = vmatpush.msra.mxu0 %v221
    %516 = vmatpush.msra.mxu0 %v217
    %517 = vmatpush.msra.mxu0 %v213
    %518 = vmatpush.msra.mxu0 %v209
    %519 = vmatpush.msra.mxu0 %v205
    %520 = vmatpush.msra.mxu0 %v201
    %521 = vmatpush.msra.mxu0 %v197
    %522 = vmatpush.msra.mxu0 %v193
    %523 = vmatmul.f32.gmra.mxu0 %v58
    %v524 = vpop.f32.mrf.mxu0
    %v525 = vadd.f32 %v502, %v524
    %526 = vmatmul.f32.gmra.mxu0 %v61
    %v527 = vpop.f32.mrf.mxu0
    %v528 = vadd.f32 %v505, %v527
    %529 = vdwg.mxu0
    %v530 = vld [vmem:[#allocation5] sm:$0xff]
    %v531 = vld [vmem:[#allocation5 + $0x8] sm:$0xff]
    %v532 = vld [vmem:[#allocation5 + $0x10] sm:$0xff]
    %v533 = vld [vmem:[#allocation5 + $0x18] sm:$0xff]
    %v534 = vld [vmem:[#allocation5 + $0x20] sm:$0xff]
    %v535 = vld [vmem:[#allocation5 + $0x28] sm:$0xff]
    %v536 = vld [vmem:[#allocation5 + $0x30] sm:$0xff]
    %v537 = vld [vmem:[#allocation5 + $0x38] sm:$0xff]
    %v538 = vld [vmem:[#allocation5 + $0x40] sm:$0xff]
    %v539 = vld [vmem:[#allocation5 + $0x48] sm:$0xff]
    %v540 = vld [vmem:[#allocation5 + $0x50] sm:$0xff]
    %v541 = vld [vmem:[#allocation5 + $0x58] sm:$0xff]
    %v542 = vld [vmem:[#allocation5 + $0x60] sm:$0xff]
    %v543 = vld [vmem:[#allocation5 + $0x68] sm:$0xff]
    %v544 = vld [vmem:[#allocation5 + $0x70] sm:$0xff]
    %v545 = vld [vmem:[#allocation5 + $0x78] sm:$0xff]
    %v546 = vld [vmem:[#allocation5 + $0x80] sm:$0xff]
    %v547 = vld [vmem:[#allocation5 + $0x88] sm:$0xff]
    %v548 = vld [vmem:[#allocation5 + $0x90] sm:$0xff]
    %v549 = vld [vmem:[#allocation5 + $0x98] sm:$0xff]
    %v550 = vld [vmem:[#allocation5 + $0xa0] sm:$0xff]
    %v551 = vld [vmem:[#allocation5 + $0xa8] sm:$0xff]
    %v552 = vld [vmem:[#allocation5 + $0xb0] sm:$0xff]
    %v553 = vld [vmem:[#allocation5 + $0xb8] sm:$0xff]
    %v554 = vld [vmem:[#allocation5 + $0xc0] sm:$0xff]
    %v555 = vld [vmem:[#allocation5 + $0xc8] sm:$0xff]
    %v556 = vld [vmem:[#allocation5 + $0xd0] sm:$0xff]
    %v557 = vld [vmem:[#allocation5 + $0xd8] sm:$0xff]
    %v558 = vld [vmem:[#allocation5 + $0xe0] sm:$0xff]
    %v559 = vld [vmem:[#allocation5 + $0xe8] sm:$0xff]
    %v560 = vld [vmem:[#allocation5 + $0xf0] sm:$0xff]
    %v561 = vld [vmem:[#allocation5 + $0xf8] sm:$0xff]
    %v562 = vld [vmem:[#allocation5 + $0x100] sm:$0xff]
    %v563 = vld [vmem:[#allocation5 + $0x108] sm:$0xff]
    %v564 = vld [vmem:[#allocation5 + $0x110] sm:$0xff]
    %v565 = vld [vmem:[#allocation5 + $0x118] sm:$0xff]
    %v566 = vld [vmem:[#allocation5 + $0x120] sm:$0xff]
    %v567 = vld [vmem:[#allocation5 + $0x128] sm:$0xff]
    %v568 = vld [vmem:[#allocation5 + $0x130] sm:$0xff]
    %v569 = vld [vmem:[#allocation5 + $0x138] sm:$0xff]
    %v570 = vld [vmem:[#allocation5 + $0x140] sm:$0xff]
    %v571 = vld [vmem:[#allocation5 + $0x148] sm:$0xff]
    %v572 = vld [vmem:[#allocation5 + $0x150] sm:$0xff]
    %v573 = vld [vmem:[#allocation5 + $0x158] sm:$0xff]
    %v574 = vld [vmem:[#allocation5 + $0x160] sm:$0xff]
    %v575 = vld [vmem:[#allocation5 + $0x168] sm:$0xff]
    %v576 = vld [vmem:[#allocation5 + $0x170] sm:$0xff]
    %v577 = vld [vmem:[#allocation5 + $0x178] sm:$0xff]
    %v578 = vld [vmem:[#allocation5 + $0x180] sm:$0xff]
    %v579 = vld [vmem:[#allocation5 + $0x188] sm:$0xff]
    %v580 = vld [vmem:[#allocation5 + $0x190] sm:$0xff]
    %v581 = vld [vmem:[#allocation5 + $0x198] sm:$0xff]
    %v582 = vld [vmem:[#allocation5 + $0x1a0] sm:$0xff]
    %v583 = vld [vmem:[#allocation5 + $0x1a8] sm:$0xff]
    %v584 = vld [vmem:[#allocation5 + $0x1b0] sm:$0xff]
    %v585 = vld [vmem:[#allocation5 + $0x1b8] sm:$0xff]
    %v586 = vld [vmem:[#allocation5 + $0x1c0] sm:$0xff]
    %v587 = vld [vmem:[#allocation5 + $0x1c8] sm:$0xff]
    %v588 = vld [vmem:[#allocation5 + $0x1d0] sm:$0xff]
    %v589 = vld [vmem:[#allocation5 + $0x1d8] sm:$0xff]
    %v590 = vld [vmem:[#allocation5 + $0x1e0] sm:$0xff]
    %v591 = vld [vmem:[#allocation5 + $0x1e8] sm:$0xff]
    %v592 = vld [vmem:[#allocation5 + $0x1f0] sm:$0xff]
    %v593 = vld [vmem:[#allocation5 + $0x1f8] sm:$0xff]
    %v594 = vld [vmem:[#allocation5 + $0x200] sm:$0xff]
    %v595 = vld [vmem:[#allocation5 + $0x208] sm:$0xff]
    %v596 = vld [vmem:[#allocation5 + $0x210] sm:$0xff]
    %v597 = vld [vmem:[#allocation5 + $0x218] sm:$0xff]
    %v598 = vld [vmem:[#allocation5 + $0x220] sm:$0xff]
    %v599 = vld [vmem:[#allocation5 + $0x228] sm:$0xff]
    %v600 = vld [vmem:[#allocation5 + $0x230] sm:$0xff]
    %v601 = vld [vmem:[#allocation5 + $0x238] sm:$0xff]
    %v602 = vld [vmem:[#allocation5 + $0x240] sm:$0xff]
    %v603 = vld [vmem:[#allocation5 + $0x248] sm:$0xff]
    %v604 = vld [vmem:[#allocation5 + $0x250] sm:$0xff]
    %v605 = vld [vmem:[#allocation5 + $0x258] sm:$0xff]
    %v606 = vld [vmem:[#allocation5 + $0x260] sm:$0xff]
    %v607 = vld [vmem:[#allocation5 + $0x268] sm:$0xff]
    %v608 = vld [vmem:[#allocation5 + $0x270] sm:$0xff]
    %v609 = vld [vmem:[#allocation5 + $0x278] sm:$0xff]
    %v610 = vld [vmem:[#allocation5 + $0x280] sm:$0xff]
    %v611 = vld [vmem:[#allocation5 + $0x288] sm:$0xff]
    %v612 = vld [vmem:[#allocation5 + $0x290] sm:$0xff]
    %v613 = vld [vmem:[#allocation5 + $0x298] sm:$0xff]
    %v614 = vld [vmem:[#allocation5 + $0x2a0] sm:$0xff]
    %v615 = vld [vmem:[#allocation5 + $0x2a8] sm:$0xff]
    %v616 = vld [vmem:[#allocation5 + $0x2b0] sm:$0xff]
    %v617 = vld [vmem:[#allocation5 + $0x2b8] sm:$0xff]
    %v618 = vld [vmem:[#allocation5 + $0x2c0] sm:$0xff]
    %v619 = vld [vmem:[#allocation5 + $0x2c8] sm:$0xff]
    %v620 = vld [vmem:[#allocation5 + $0x2d0] sm:$0xff]
    %v621 = vld [vmem:[#allocation5 + $0x2d8] sm:$0xff]
    %v622 = vld [vmem:[#allocation5 + $0x2e0] sm:$0xff]
    %v623 = vld [vmem:[#allocation5 + $0x2e8] sm:$0xff]
    %v624 = vld [vmem:[#allocation5 + $0x2f0] sm:$0xff]
    %v625 = vld [vmem:[#allocation5 + $0x2f8] sm:$0xff]
    %v626 = vld [vmem:[#allocation5 + $0x300] sm:$0xff]
    %v627 = vld [vmem:[#allocation5 + $0x308] sm:$0xff]
    %v628 = vld [vmem:[#allocation5 + $0x310] sm:$0xff]
    %v629 = vld [vmem:[#allocation5 + $0x318] sm:$0xff]
    %v630 = vld [vmem:[#allocation5 + $0x320] sm:$0xff]
    %v631 = vld [vmem:[#allocation5 + $0x328] sm:$0xff]
    %v632 = vld [vmem:[#allocation5 + $0x330] sm:$0xff]
    %v633 = vld [vmem:[#allocation5 + $0x338] sm:$0xff]
    %v634 = vld [vmem:[#allocation5 + $0x340] sm:$0xff]
    %v635 = vld [vmem:[#allocation5 + $0x348] sm:$0xff]
    %v636 = vld [vmem:[#allocation5 + $0x350] sm:$0xff]
    %v637 = vld [vmem:[#allocation5 + $0x358] sm:$0xff]
    %v638 = vld [vmem:[#allocation5 + $0x360] sm:$0xff]
    %v639 = vld [vmem:[#allocation5 + $0x368] sm:$0xff]
    %v640 = vld [vmem:[#allocation5 + $0x370] sm:$0xff]
    %v641 = vld [vmem:[#allocation5 + $0x378] sm:$0xff]
    %v642 = vld [vmem:[#allocation5 + $0x380] sm:$0xff]
    %v643 = vld [vmem:[#allocation5 + $0x388] sm:$0xff]
    %v644 = vld [vmem:[#allocation5 + $0x390] sm:$0xff]
    %v645 = vld [vmem:[#allocation5 + $0x398] sm:$0xff]
    %v646 = vld [vmem:[#allocation5 + $0x3a0] sm:$0xff]
    %v647 = vld [vmem:[#allocation5 + $0x3a8] sm:$0xff]
    %v648 = vld [vmem:[#allocation5 + $0x3b0] sm:$0xff]
    %v649 = vld [vmem:[#allocation5 + $0x3b8] sm:$0xff]
    %v650 = vld [vmem:[#allocation5 + $0x3c0] sm:$0xff]
    %v651 = vld [vmem:[#allocation5 + $0x3c8] sm:$0xff]
    %v652 = vld [vmem:[#allocation5 + $0x3d0] sm:$0xff]
    %v653 = vld [vmem:[#allocation5 + $0x3d8] sm:$0xff]
    %v654 = vld [vmem:[#allocation5 + $0x3e0] sm:$0xff]
    %v655 = vld [vmem:[#allocation5 + $0x3e8] sm:$0xff]
    %v656 = vld [vmem:[#allocation5 + $0x3f0] sm:$0xff]
    %v657 = vld [vmem:[#allocation5 + $0x3f8] sm:$0xff]
    %v658 = vld [vmem:[#allocation5 + $0x400] sm:$0xff]
    %v659 = vld [vmem:[#allocation5 + $0x408] sm:$0xff]
    %v660 = vld [vmem:[#allocation5 + $0x410] sm:$0xff]
    %v661 = vld [vmem:[#allocation5 + $0x418] sm:$0xff]
    %v662 = vld [vmem:[#allocation5 + $0x420] sm:$0xff]
    %v663 = vld [vmem:[#allocation5 + $0x428] sm:$0xff]
    %v664 = vld [vmem:[#allocation5 + $0x430] sm:$0xff]
    %v665 = vld [vmem:[#allocation5 + $0x438] sm:$0xff]
    %v666 = vld [vmem:[#allocation5 + $0x440] sm:$0xff]
    %v667 = vld [vmem:[#allocation5 + $0x448] sm:$0xff]
    %v668 = vld [vmem:[#allocation5 + $0x450] sm:$0xff]
    %v669 = vld [vmem:[#allocation5 + $0x458] sm:$0xff]
    %v670 = vld [vmem:[#allocation5 + $0x460] sm:$0xff]
    %v671 = vld [vmem:[#allocation5 + $0x468] sm:$0xff]
    %v672 = vld [vmem:[#allocation5 + $0x470] sm:$0xff]
    %v673 = vld [vmem:[#allocation5 + $0x478] sm:$0xff]
    %v674 = vld [vmem:[#allocation5 + $0x480] sm:$0xff]
    %v675 = vld [vmem:[#allocation5 + $0x488] sm:$0xff]
    %v676 = vld [vmem:[#allocation5 + $0x490] sm:$0xff]
    %v677 = vld [vmem:[#allocation5 + $0x498] sm:$0xff]
    %v678 = vld [vmem:[#allocation5 + $0x4a0] sm:$0xff]
    %v679 = vld [vmem:[#allocation5 + $0x4a8] sm:$0xff]
    %v680 = vld [vmem:[#allocation5 + $0x4b0] sm:$0xff]
    %v681 = vld [vmem:[#allocation5 + $0x4b8] sm:$0xff]
    %v682 = vld [vmem:[#allocation5 + $0x4c0] sm:$0xff]
    %v683 = vld [vmem:[#allocation5 + $0x4c8] sm:$0xff]
    %v684 = vld [vmem:[#allocation5 + $0x4d0] sm:$0xff]
    %v685 = vld [vmem:[#allocation5 + $0x4d8] sm:$0xff]
    %v686 = vld [vmem:[#allocation5 + $0x4e0] sm:$0xff]
    %v687 = vld [vmem:[#allocation5 + $0x4e8] sm:$0xff]
    %v688 = vld [vmem:[#allocation5 + $0x4f0] sm:$0xff]
    %v689 = vld [vmem:[#allocation5 + $0x4f8] sm:$0xff]
    %v690 = vld [vmem:[#allocation5 + $0x500] sm:$0xff]
    %v691 = vld [vmem:[#allocation5 + $0x508] sm:$0xff]
    %v692 = vld [vmem:[#allocation5 + $0x510] sm:$0xff]
    %v693 = vld [vmem:[#allocation5 + $0x518] sm:$0xff]
    %v694 = vld [vmem:[#allocation5 + $0x520] sm:$0xff]
    %v695 = vld [vmem:[#allocation5 + $0x528] sm:$0xff]
    %v696 = vld [vmem:[#allocation5 + $0x530] sm:$0xff]
    %v697 = vld [vmem:[#allocation5 + $0x538] sm:$0xff]
    %v698 = vld [vmem:[#allocation5 + $0x540] sm:$0xff]
    %v699 = vld [vmem:[#allocation5 + $0x548] sm:$0xff]
    %v700 = vld [vmem:[#allocation5 + $0x550] sm:$0xff]
    %v701 = vld [vmem:[#allocation5 + $0x558] sm:$0xff]
    %v702 = vld [vmem:[#allocation5 + $0x560] sm:$0xff]
    %v703 = vld [vmem:[#allocation5 + $0x568] sm:$0xff]
    %v704 = vld [vmem:[#allocation5 + $0x570] sm:$0xff]
    %v705 = vld [vmem:[#allocation5 + $0x578] sm:$0xff]
    %v706 = vld [vmem:[#allocation5 + $0x580] sm:$0xff]
    %v707 = vld [vmem:[#allocation5 + $0x588] sm:$0xff]
    %v708 = vld [vmem:[#allocation5 + $0x590] sm:$0xff]
    %v709 = vld [vmem:[#allocation5 + $0x598] sm:$0xff]
    %v710 = vld [vmem:[#allocation5 + $0x5a0] sm:$0xff]
    %v711 = vld [vmem:[#allocation5 + $0x5a8] sm:$0xff]
    %v712 = vld [vmem:[#allocation5 + $0x5b0] sm:$0xff]
    %v713 = vld [vmem:[#allocation5 + $0x5b8] sm:$0xff]
    %v714 = vld [vmem:[#allocation5 + $0x5c0] sm:$0xff]
    %v715 = vld [vmem:[#allocation5 + $0x5c8] sm:$0xff]
    %v716 = vld [vmem:[#allocation5 + $0x5d0] sm:$0xff]
    %v717 = vld [vmem:[#allocation5 + $0x5d8] sm:$0xff]
    %v718 = vld [vmem:[#allocation5 + $0x5e0] sm:$0xff]
    %v719 = vld [vmem:[#allocation5 + $0x5e8] sm:$0xff]
    %v720 = vld [vmem:[#allocation5 + $0x5f0] sm:$0xff]
    %v721 = vld [vmem:[#allocation5 + $0x5f8] sm:$0xff]
    %722 = vmatpush.msra.mxu0 %v590
    %723 = vmatpush.msra.mxu0 %v586
    %724 = vmatpush.msra.mxu0 %v582
    %725 = vmatpush.msra.mxu0 %v578
    %726 = vmatpush.msra.mxu0 %v574
    %727 = vmatpush.msra.mxu0 %v570
    %728 = vmatpush.msra.mxu0 %v566
    %729 = vmatpush.msra.mxu0 %v562
    %730 = vmatpush.msra.mxu0 %v558
    %731 = vmatpush.msra.mxu0 %v554
    %732 = vmatpush.msra.mxu0 %v550
    %733 = vmatpush.msra.mxu0 %v546
    %734 = vmatpush.msra.mxu0 %v542
    %735 = vmatpush.msra.mxu0 %v538
    %736 = vmatpush.msra.mxu0 %v534
    %737 = vmatpush.msra.mxu0 %v530
    %738 = vmatmul.f32.gmra.mxu0 %v56
    %v739 = vpop.f32.mrf.mxu0
    %v740 = vadd.f32 0.0, %v739
    %741 = vmatmul.f32.gmra.mxu0 %v59
    %v742 = vpop.f32.mrf.mxu0
    %v743 = vadd.f32 0.0, %v742
    %744 = vdwg.mxu0
    %745 = vmatpush.msra.mxu0 %v654
    %746 = vmatpush.msra.mxu0 %v650
    %747 = vmatpush.msra.mxu0 %v646
    %748 = vmatpush.msra.mxu0 %v642
    %749 = vmatpush.msra.mxu0 %v638
    %750 = vmatpush.msra.mxu0 %v634
    %751 = vmatpush.msra.mxu0 %v630
    %752 = vmatpush.msra.mxu0 %v626
    %753 = vmatpush.msra.mxu0 %v622
    %754 = vmatpush.msra.mxu0 %v618
    %755 = vmatpush.msra.mxu0 %v614
    %756 = vmatpush.msra.mxu0 %v610
    %757 = vmatpush.msra.mxu0 %v606
    %758 = vmatpush.msra.mxu0 %v602
    %759 = vmatpush.msra.mxu0 %v598
    %760 = vmatpush.msra.mxu0 %v594
    %761 = vmatmul.f32.gmra.mxu0 %v57
    %v762 = vpop.f32.mrf.mxu0
    %v763 = vadd.f32 %v740, %v762
    %764 = vmatmul.f32.gmra.mxu0 %v60
    %v765 = vpop.f32.mrf.mxu0
    %v766 = vadd.f32 %v743, %v765
    %767 = vdwg.mxu0
    %768 = vmatpush.msra.mxu0 %v718
    %769 = vmatpush.msra.mxu0 %v714
    %770 = vmatpush.msra.mxu0 %v710
    %771 = vmatpush.msra.mxu0 %v706
    %772 = vmatpush.msra.mxu0 %v702
    %773 = vmatpush.msra.mxu0 %v698
    %774 = vmatpush.msra.mxu0 %v694
    %775 = vmatpush.msra.mxu0 %v690
    %776 = vmatpush.msra.mxu0 %v686
    %777 = vmatpush.msra.mxu0 %v682
    %778 = vmatpush.msra.mxu0 %v678
    %779 = vmatpush.msra.mxu0 %v674
    %780 = vmatpush.msra.mxu0 %v670
    %781 = vmatpush.msra.mxu0 %v666
    %782 = vmatpush.msra.mxu0 %v662
    %783 = vmatpush.msra.mxu0 %v658
    %784 = vmatmul.f32.gmra.mxu0 %v58
    %v785 = vpop.f32.mrf.mxu0
    %v786 = vadd.f32 %v763, %v785
    %787 = vmatmul.f32.gmra.mxu0 %v61
    %v788 = vpop.f32.mrf.mxu0
    %v789 = vadd.f32 %v766, %v788
    %790 = vdwg.mxu0
    %791 = vmatpush.msra.mxu0 %v591
    %792 = vmatpush.msra.mxu0 %v587
    %793 = vmatpush.msra.mxu0 %v583
    %794 = vmatpush.msra.mxu0 %v579
    %795 = vmatpush.msra.mxu0 %v575
    %796 = vmatpush.msra.mxu0 %v571
    %797 = vmatpush.msra.mxu0 %v567
    %798 = vmatpush.msra.mxu0 %v563
    %799 = vmatpush.msra.mxu0 %v559
    %800 = vmatpush.msra.mxu0 %v555
    %801 = vmatpush.msra.mxu0 %v551
    %802 = vmatpush.msra.mxu0 %v547
    %803 = vmatpush.msra.mxu0 %v543
    %804 = vmatpush.msra.mxu0 %v539
    %805 = vmatpush.msra.mxu0 %v535
    %806 = vmatpush.msra.mxu0 %v531
    %807 = vmatmul.f32.gmra.mxu0 %v56
    %v808 = vpop.f32.mrf.mxu0
    %v809 = vadd.f32 0.0, %v808
    %810 = vmatmul.f32.gmra.mxu0 %v59
    %v811 = vpop.f32.mrf.mxu0
    %v812 = vadd.f32 0.0, %v811
    %813 = vdwg.mxu0
    %814 = vmatpush.msra.mxu0 %v655
    %815 = vmatpush.msra.mxu0 %v651
    %816 = vmatpush.msra.mxu0 %v647
    %817 = vmatpush.msra.mxu0 %v643
    %818 = vmatpush.msra.mxu0 %v639
    %819 = vmatpush.msra.mxu0 %v635
    %820 = vmatpush.msra.mxu0 %v631
    %821 = vmatpush.msra.mxu0 %v627
    %822 = vmatpush.msra.mxu0 %v623
    %823 = vmatpush.msra.mxu0 %v619
    %824 = vmatpush.msra.mxu0 %v615
    %825 = vmatpush.msra.mxu0 %v611
    %826 = vmatpush.msra.mxu0 %v607
    %827 = vmatpush.msra.mxu0 %v603
    %828 = vmatpush.msra.mxu0 %v599
    %829 = vmatpush.msra.mxu0 %v595
    %830 = vmatmul.f32.gmra.mxu0 %v57
    %v831 = vpop.f32.mrf.mxu0
    %v832 = vadd.f32 %v809, %v831
    %833 = vmatmul.f32.gmra.mxu0 %v60
    %v834 = vpop.f32.mrf.mxu0
    %v835 = vadd.f32 %v812, %v834
    %836 = vdwg.mxu0
    %837 = vmatpush.msra.mxu0 %v719
    %838 = vmatpush.msra.mxu0 %v715
    %839 = vmatpush.msra.mxu0 %v711
    %840 = vmatpush.msra.mxu0 %v707
    %841 = vmatpush.msra.mxu0 %v703
    %842 = vmatpush.msra.mxu0 %v699
    %843 = vmatpush.msra.mxu0 %v695
    %844 = vmatpush.msra.mxu0 %v691
    %845 = vmatpush.msra.mxu0 %v687
    %846 = vmatpush.msra.mxu0 %v683
    %847 = vmatpush.msra.mxu0 %v679
    %848 = vmatpush.msra.mxu0 %v675
    %849 = vmatpush.msra.mxu0 %v671
    %850 = vmatpush.msra.mxu0 %v667
    %851 = vmatpush.msra.mxu0 %v663
    %852 = vmatpush.msra.mxu0 %v659
    %853 = vmatmul.f32.gmra.mxu0 %v58
    %v854 = vpop.f32.mrf.mxu0
    %v855 = vadd.f32 %v832, %v854
    %856 = vmatmul.f32.gmra.mxu0 %v61
    %v857 = vpop.f32.mrf.mxu0
    %v858 = vadd.f32 %v835, %v857
    %859 = vdwg.mxu0
    %860 = vmatpush.msra.mxu0 %v592
    %861 = vmatpush.msra.mxu0 %v588
    %862 = vmatpush.msra.mxu0 %v584
    %863 = vmatpush.msra.mxu0 %v580
    %864 = vmatpush.msra.mxu0 %v576
    %865 = vmatpush.msra.mxu0 %v572
    %866 = vmatpush.msra.mxu0 %v568
    %867 = vmatpush.msra.mxu0 %v564
    %868 = vmatpush.msra.mxu0 %v560
    %869 = vmatpush.msra.mxu0 %v556
    %870 = vmatpush.msra.mxu0 %v552
    %871 = vmatpush.msra.mxu0 %v548
    %872 = vmatpush.msra.mxu0 %v544
    %873 = vmatpush.msra.mxu0 %v540
    %874 = vmatpush.msra.mxu0 %v536
    %875 = vmatpush.msra.mxu0 %v532
    %876 = vmatmul.f32.gmra.mxu0 %v56
    %v877 = vpop.f32.mrf.mxu0
    %v878 = vadd.f32 0.0, %v877
    %879 = vmatmul.f32.gmra.mxu0 %v59
    %v880 = vpop.f32.mrf.mxu0
    %v881 = vadd.f32 0.0, %v880
    %882 = vdwg.mxu0
    %883 = vmatpush.msra.mxu0 %v656
    %884 = vmatpush.msra.mxu0 %v652
    %885 = vmatpush.msra.mxu0 %v648
    %886 = vmatpush.msra.mxu0 %v644
    %887 = vmatpush.msra.mxu0 %v640
    %888 = vmatpush.msra.mxu0 %v636
    %889 = vmatpush.msra.mxu0 %v632
    %890 = vmatpush.msra.mxu0 %v628
    %891 = vmatpush.msra.mxu0 %v624
    %892 = vmatpush.msra.mxu0 %v620
    %893 = vmatpush.msra.mxu0 %v616
    %894 = vmatpush.msra.mxu0 %v612
    %895 = vmatpush.msra.mxu0 %v608
    %896 = vmatpush.msra.mxu0 %v604
    %897 = vmatpush.msra.mxu0 %v600
    %898 = vmatpush.msra.mxu0 %v596
    %899 = vmatmul.f32.gmra.mxu0 %v57
    %v900 = vpop.f32.mrf.mxu0
    %v901 = vadd.f32 %v878, %v900
    %902 = vmatmul.f32.gmra.mxu0 %v60
    %v903 = vpop.f32.mrf.mxu0
    %v904 = vadd.f32 %v881, %v903
    %905 = vdwg.mxu0
    %906 = vmatpush.msra.mxu0 %v720
    %907 = vmatpush.msra.mxu0 %v716
    %908 = vmatpush.msra.mxu0 %v712
    %909 = vmatpush.msra.mxu0 %v708
    %910 = vmatpush.msra.mxu0 %v704
    %911 = vmatpush.msra.mxu0 %v700
    %912 = vmatpush.msra.mxu0 %v696
    %913 = vmatpush.msra.mxu0 %v692
    %914 = vmatpush.msra.mxu0 %v688
    %915 = vmatpush.msra.mxu0 %v684
    %916 = vmatpush.msra.mxu0 %v680
    %917 = vmatpush.msra.mxu0 %v676
    %918 = vmatpush.msra.mxu0 %v672
    %919 = vmatpush.msra.mxu0 %v668
    %920 = vmatpush.msra.mxu0 %v664
    %921 = vmatpush.msra.mxu0 %v660
    %922 = vmatmul.f32.gmra.mxu0 %v58
    %v923 = vpop.f32.mrf.mxu0
    %v924 = vadd.f32 %v901, %v923
    %925 = vmatmul.f32.gmra.mxu0 %v61
    %v926 = vpop.f32.mrf.mxu0
    %v927 = vadd.f32 %v904, %v926
    %928 = vdwg.mxu0
    %929 = vmatpush.msra.mxu0 %v593
    %930 = vmatpush.msra.mxu0 %v589
    %931 = vmatpush.msra.mxu0 %v585
    %932 = vmatpush.msra.mxu0 %v581
    %933 = vmatpush.msra.mxu0 %v577
    %934 = vmatpush.msra.mxu0 %v573
    %935 = vmatpush.msra.mxu0 %v569
    %936 = vmatpush.msra.mxu0 %v565
    %937 = vmatpush.msra.mxu0 %v561
    %938 = vmatpush.msra.mxu0 %v557
    %939 = vmatpush.msra.mxu0 %v553
    %940 = vmatpush.msra.mxu0 %v549
    %941 = vmatpush.msra.mxu0 %v545
    %942 = vmatpush.msra.mxu0 %v541
    %943 = vmatpush.msra.mxu0 %v537
    %944 = vmatpush.msra.mxu0 %v533
    %945 = vmatmul.f32.gmra.mxu0 %v56
    %v946 = vpop.f32.mrf.mxu0
    %v947 = vadd.f32 0.0, %v946
    %948 = vmatmul.f32.gmra.mxu0 %v59
    %v949 = vpop.f32.mrf.mxu0
    %v950 = vadd.f32 0.0, %v949
    %951 = vdwg.mxu0
    %952 = vmatpush.msra.mxu0 %v657
    %953 = vmatpush.msra.mxu0 %v653
    %954 = vmatpush.msra.mxu0 %v649
    %955 = vmatpush.msra.mxu0 %v645
    %956 = vmatpush.msra.mxu0 %v641
    %957 = vmatpush.msra.mxu0 %v637
    %958 = vmatpush.msra.mxu0 %v633
    %959 = vmatpush.msra.mxu0 %v629
    %960 = vmatpush.msra.mxu0 %v625
    %961 = vmatpush.msra.mxu0 %v621
    %962 = vmatpush.msra.mxu0 %v617
    %963 = vmatpush.msra.mxu0 %v613
    %964 = vmatpush.msra.mxu0 %v609
    %965 = vmatpush.msra.mxu0 %v605
    %966 = vmatpush.msra.mxu0 %v601
    %967 = vmatpush.msra.mxu0 %v597
    %968 = vmatmul.f32.gmra.mxu0 %v57
    %v969 = vpop.f32.mrf.mxu0
    %v970 = vadd.f32 %v947, %v969
    %971 = vmatmul.f32.gmra.mxu0 %v60
    %v972 = vpop.f32.mrf.mxu0
    %v973 = vadd.f32 %v950, %v972
    %974 = vdwg.mxu0
    %975 = vmatpush.msra.mxu0 %v721
    %976 = vmatpush.msra.mxu0 %v717
    %977 = vmatpush.msra.mxu0 %v713
    %978 = vmatpush.msra.mxu0 %v709
    %979 = vmatpush.msra.mxu0 %v705
    %980 = vmatpush.msra.mxu0 %v701
    %981 = vmatpush.msra.mxu0 %v697
    %982 = vmatpush.msra.mxu0 %v693
    %983 = vmatpush.msra.mxu0 %v689
    %984 = vmatpush.msra.mxu0 %v685
    %985 = vmatpush.msra.mxu0 %v681
    %986 = vmatpush.msra.mxu0 %v677
    %987 = vmatpush.msra.mxu0 %v673
    %988 = vmatpush.msra.mxu0 %v669
    %989 = vmatpush.msra.mxu0 %v665
    %990 = vmatpush.msra.mxu0 %v661
    %991 = vmatmul.f32.gmra.mxu0 %v58
    %v992 = vpop.f32.mrf.mxu0
    %v993 = vadd.f32 %v970, %v992
    %994 = vmatmul.f32.gmra.mxu0 %v61
    %v995 = vpop.f32.mrf.mxu0
    %v996 = vadd.f32 %v973, %v995
    %997 = vdwg.mxu0
    %v998 = vmul.f32 %v786, %v786
    %v999 = vmul.f32 %v855, %v855
    %v1000 = vmul.f32 %v924, %v924
    %v1001 = vmul.f32 %v993, %v993
    %v1002 = vmul.f32 %v789, %v789
    %v1003 = vmul.f32 %v858, %v858
    %v1004 = vmul.f32 %v927, %v927
    %v1005 = vmul.f32 %v996, %v996
    %v1006 = vadd.f32 %v998, %v999
    %v1007 = vadd.f32 %v1006, %v1000
    %v1008 = vadd.f32 %v1007, %v1001
    %1009 = vadd.xlane.f32.xlu0 %v1008
    %v1010 = vpop.xlane.xlu0 %1009
    %v1011 = vadd.f32 %v1002, %v1003
    %v1012 = vadd.f32 %v1011, %v1004
    %v1013 = vadd.f32 %v1012, %v1005
    %1014 = vadd.xlane.f32.xlu0 %v1013
    %v1015 = vpop.xlane.xlu0 %1014
    %v1016 = vrsqrt.pop %v1010
    %v1017 = vmul.f32 %v1016, %v1010
    %v1018 = vmul.f32 %v1017, %v1016
    %v1019 = vmul.f32 0.5, %v1018
    %v1020 = vsub.f32 1.5, %v1019
    %v1021 = vmul.f32 %v1016, %v1020
    %v1022 = vmul.f32 %v1010, %v1021
    %vm1023 = vcmp.eq.f32.partialorder %v1010, inf
    %v1024 = vsel %vm1023, %v1010, %v1022
    %vm1025 = vcmp.eq.f32.partialorder %v1010, 0.0
    %v1026 = vand.u32 %v1010, 2147483648
    %v1027 = vsel %vm1025, %v1026, %v1024
    %v1028 = vrsqrt.pop %v1015
    %v1029 = vmul.f32 %v1028, %v1015
    %v1030 = vmul.f32 %v1029, %v1028
    %v1031 = vmul.f32 0.5, %v1030
    %v1032 = vsub.f32 1.5, %v1031
    %v1033 = vmul.f32 %v1028, %v1032
    %v1034 = vmul.f32 %v1015, %v1033
    %vm1035 = vcmp.eq.f32.partialorder %v1015, inf
    %v1036 = vsel %vm1035, %v1015, %v1034
    %vm1037 = vcmp.eq.f32.partialorder %v1015, 0.0
    %v1038 = vand.u32 %v1015, 2147483648
    %v1039 = vsel %vm1037, %v1038, %v1036
    %v1040 = vmax.f32 %v1027, 1e-08
    %v1041 = vmax.f32 %v1039, 1e-08
    %v1042 = vrcp.pop %v1040
    %v1043 = vmul.f32 %v1040, %v1042
    %v1044 = vsub.f32 1.0, %v1043
    %v1045 = vmul.f32 %v1042, %v1044
    %v1046 = vadd.f32 %v1042, %v1045
    %vm1047 = vweird.f32 %v1040
    %vm1048 = vweird.f32 %v1042
    %vm1049 = vmor %vm1047, %vm1048
    %v1050 = vsel %vm1049, %v1042, %v1046
    %v1051 = vand.u32 2147483647, %v1040
    %vm1052 = vcmp.eq.f32.partialorder %v1051, 8.507059e+37
    %v1053 = vand.u32 %v1040, 2147483648
    %v1054 = vor.u32 1.1754944e-38, %v1053
    %v1055 = vsel %vm1052, %v1054, %v1050
    %v1056 = vmul.f32 1.0, %v1055
    %v1057 = vrcp.pop %v1041
    %v1058 = vmul.f32 %v1041, %v1057
    %v1059 = vsub.f32 1.0, %v1058
    %v1060 = vmul.f32 %v1057, %v1059
    %v1061 = vadd.f32 %v1057, %v1060
    %vm1062 = vweird.f32 %v1041
    %vm1063 = vweird.f32 %v1057
    %vm1064 = vmor %vm1062, %vm1063
    %v1065 = vsel %vm1064, %v1057, %v1061
    %v1066 = vand.u32 2147483647, %v1041
    %vm1067 = vcmp.eq.f32.partialorder %v1066, 8.507059e+37
    %v1068 = vand.u32 %v1041, 2147483648
    %v1069 = vor.u32 1.1754944e-38, %v1068
    %v1070 = vsel %vm1067, %v1069, %v1065
    %v1071 = vmul.f32 1.0, %v1070
    %v1072 = vld [vmem:[%s1] sm:$0xff]
    %v1073 = vld [vmem:[%s1 + $0x8] sm:$0xff]
    %v1074 = vld [vmem:[%s1 + $0x10] sm:$0xff]
    %v1075 = vld [vmem:[%s1 + $0x18] sm:$0xff]
    %v1076 = vld [vmem:[%s1 + $0x20] sm:$0xff]
    %v1077 = vld [vmem:[%s1 + $0x28] sm:$0xff]
    %v1078 = vld [vmem:[%s1 + $0x30] sm:$0xff]
    %v1079 = vld [vmem:[%s1 + $0x38] sm:$0xff]
    %v1080 = vld [vmem:[%s1 + $0x40] sm:$0xff]
    %v1081 = vld [vmem:[%s1 + $0x48] sm:$0xff]
    %v1082 = vld [vmem:[%s1 + $0x50] sm:$0xff]
    %v1083 = vld [vmem:[%s1 + $0x58] sm:$0xff]
    %v1084 = vld [vmem:[%s1 + $0x60] sm:$0xff]
    %v1085 = vld [vmem:[%s1 + $0x68] sm:$0xff]
    %v1086 = vld [vmem:[%s1 + $0x70] sm:$0xff]
    %v1087 = vld [vmem:[%s1 + $0x78] sm:$0xff]
    %v1088 = vld [vmem:[%s1 + $0x80] sm:$0xff]
    %v1089 = vld [vmem:[%s1 + $0x88] sm:$0xff]
    %v1090 = vld [vmem:[%s1 + $0x90] sm:$0xff]
    %v1091 = vld [vmem:[%s1 + $0x98] sm:$0xff]
    %v1092 = vld [vmem:[%s1 + $0xa0] sm:$0xff]
    %v1093 = vld [vmem:[%s1 + $0xa8] sm:$0xff]
    %v1094 = vld [vmem:[%s1 + $0xb0] sm:$0xff]
    %v1095 = vld [vmem:[%s1 + $0xb8] sm:$0xff]
    %v1096 = vld [vmem:[%s1 + $0xc0] sm:$0xff]
    %v1097 = vld [vmem:[%s1 + $0xc8] sm:$0xff]
    %v1098 = vld [vmem:[%s1 + $0xd0] sm:$0xff]
    %v1099 = vld [vmem:[%s1 + $0xd8] sm:$0xff]
    %v1100 = vld [vmem:[%s1 + $0xe0] sm:$0xff]
    %v1101 = vld [vmem:[%s1 + $0xe8] sm:$0xff]
    %v1102 = vld [vmem:[%s1 + $0xf0] sm:$0xff]
    %v1103 = vld [vmem:[%s1 + $0xf8] sm:$0xff]
    %v1104 = vld [vmem:[%s1 + $0x100] sm:$0xff]
    %v1105 = vld [vmem:[%s1 + $0x108] sm:$0xff]
    %v1106 = vld [vmem:[%s1 + $0x110] sm:$0xff]
    %v1107 = vld [vmem:[%s1 + $0x118] sm:$0xff]
    %v1108 = vld [vmem:[%s1 + $0x120] sm:$0xff]
    %v1109 = vld [vmem:[%s1 + $0x128] sm:$0xff]
    %v1110 = vld [vmem:[%s1 + $0x130] sm:$0xff]
    %v1111 = vld [vmem:[%s1 + $0x138] sm:$0xff]
    %v1112 = vld [vmem:[%s1 + $0x140] sm:$0xff]
    %v1113 = vld [vmem:[%s1 + $0x148] sm:$0xff]
    %v1114 = vld [vmem:[%s1 + $0x150] sm:$0xff]
    %v1115 = vld [vmem:[%s1 + $0x158] sm:$0xff]
    %v1116 = vld [vmem:[%s1 + $0x160] sm:$0xff]
    %v1117 = vld [vmem:[%s1 + $0x168] sm:$0xff]
    %v1118 = vld [vmem:[%s1 + $0x170] sm:$0xff]
    %v1119 = vld [vmem:[%s1 + $0x178] sm:$0xff]
    %v1120 = vld [vmem:[%s1 + $0x180] sm:$0xff]
    %v1121 = vld [vmem:[%s1 + $0x188] sm:$0xff]
    %v1122 = vld [vmem:[%s1 + $0x190] sm:$0xff]
    %v1123 = vld [vmem:[%s1 + $0x198] sm:$0xff]
    %v1124 = vld [vmem:[%s1 + $0x1a0] sm:$0xff]
    %v1125 = vld [vmem:[%s1 + $0x1a8] sm:$0xff]
    %v1126 = vld [vmem:[%s1 + $0x1b0] sm:$0xff]
    %v1127 = vld [vmem:[%s1 + $0x1b8] sm:$0xff]
    %v1128 = vld [vmem:[%s1 + $0x1c0] sm:$0xff]
    %v1129 = vld [vmem:[%s1 + $0x1c8] sm:$0xff]
    %v1130 = vld [vmem:[%s1 + $0x1d0] sm:$0xff]
    %v1131 = vld [vmem:[%s1 + $0x1d8] sm:$0xff]
    %v1132 = vld [vmem:[%s1 + $0x1e0] sm:$0xff]
    %v1133 = vld [vmem:[%s1 + $0x1e8] sm:$0xff]
    %v1134 = vld [vmem:[%s1 + $0x1f0] sm:$0xff]
    %v1135 = vld [vmem:[%s1 + $0x1f8] sm:$0xff]
    %1136 = vmatpush.msra.mxu0 %v1087
    %1137 = vmatpush.msra.mxu0 %v1086
    %1138 = vmatpush.msra.mxu0 %v1085
    %1139 = vmatpush.msra.mxu0 %v1084
    %1140 = vmatpush.msra.mxu0 %v1083
    %1141 = vmatpush.msra.mxu0 %v1082
    %1142 = vmatpush.msra.mxu0 %v1081
    %1143 = vmatpush.msra.mxu0 %v1080
    %1144 = vmatpush.msra.mxu0 %v1079
    %1145 = vmatpush.msra.mxu0 %v1078
    %1146 = vmatpush.msra.mxu0 %v1077
    %1147 = vmatpush.msra.mxu0 %v1076
    %1148 = vmatpush.msra.mxu0 %v1075
    %1149 = vmatpush.msra.mxu0 %v1074
    %1150 = vmatpush.msra.mxu0 %v1073
    %1151 = vmatpush.msra.mxu0 %v1072
    %1152 = vmatmul.f32.gmra.mxu0 %v786
    %v1153 = vpop.f32.mrf.mxu0
    %v1154 = vadd.f32 0.0, %v1153
    %1155 = vmatmul.f32.gmra.mxu0 %v789
    %v1156 = vpop.f32.mrf.mxu0
    %v1157 = vadd.f32 0.0, %v1156
    %1158 = vdwg.mxu0
    %1159 = vmatpush.msra.mxu0 %v1103
    %1160 = vmatpush.msra.mxu0 %v1102
    %1161 = vmatpush.msra.mxu0 %v1101
    %1162 = vmatpush.msra.mxu0 %v1100
    %1163 = vmatpush.msra.mxu0 %v1099
    %1164 = vmatpush.msra.mxu0 %v1098
    %1165 = vmatpush.msra.mxu0 %v1097
    %1166 = vmatpush.msra.mxu0 %v1096
    %1167 = vmatpush.msra.mxu0 %v1095
    %1168 = vmatpush.msra.mxu0 %v1094
    %1169 = vmatpush.msra.mxu0 %v1093
    %1170 = vmatpush.msra.mxu0 %v1092
    %1171 = vmatpush.msra.mxu0 %v1091
    %1172 = vmatpush.msra.mxu0 %v1090
    %1173 = vmatpush.msra.mxu0 %v1089
    %1174 = vmatpush.msra.mxu0 %v1088
    %1175 = vmatmul.f32.gmra.mxu0 %v855
    %v1176 = vpop.f32.mrf.mxu0
    %v1177 = vadd.f32 %v1154, %v1176
    %1178 = vmatmul.f32.gmra.mxu0 %v858
    %v1179 = vpop.f32.mrf.mxu0
    %v1180 = vadd.f32 %v1157, %v1179
    %1181 = vdwg.mxu0
    %1182 = vmatpush.msra.mxu0 %v1119
    %1183 = vmatpush.msra.mxu0 %v1118
    %1184 = vmatpush.msra.mxu0 %v1117
    %1185 = vmatpush.msra.mxu0 %v1116
    %1186 = vmatpush.msra.mxu0 %v1115
    %1187 = vmatpush.msra.mxu0 %v1114
    %1188 = vmatpush.msra.mxu0 %v1113
    %1189 = vmatpush.msra.mxu0 %v1112
    %1190 = vmatpush.msra.mxu0 %v1111
    %1191 = vmatpush.msra.mxu0 %v1110
    %1192 = vmatpush.msra.mxu0 %v1109
    %1193 = vmatpush.msra.mxu0 %v1108
    %1194 = vmatpush.msra.mxu0 %v1107
    %1195 = vmatpush.msra.mxu0 %v1106
    %1196 = vmatpush.msra.mxu0 %v1105
    %1197 = vmatpush.msra.mxu0 %v1104
    %1198 = vmatmul.f32.gmra.mxu0 %v924
    %v1199 = vpop.f32.mrf.mxu0
    %v1200 = vadd.f32 %v1177, %v1199
    %1201 = vmatmul.f32.gmra.mxu0 %v927
    %v1202 = vpop.f32.mrf.mxu0
    %v1203 = vadd.f32 %v1180, %v1202
    %1204 = vdwg.mxu0
    %1205 = vmatpush.msra.mxu0 %v1135
    %1206 = vmatpush.msra.mxu0 %v1134
    %1207 = vmatpush.msra.mxu0 %v1133
    %1208 = vmatpush.msra.mxu0 %v1132
    %1209 = vmatpush.msra.mxu0 %v1131
    %1210 = vmatpush.msra.mxu0 %v1130
    %1211 = vmatpush.msra.mxu0 %v1129
    %1212 = vmatpush.msra.mxu0 %v1128
    %1213 = vmatpush.msra.mxu0 %v1127
    %1214 = vmatpush.msra.mxu0 %v1126
    %1215 = vmatpush.msra.mxu0 %v1125
    %1216 = vmatpush.msra.mxu0 %v1124
    %1217 = vmatpush.msra.mxu0 %v1123
    %1218 = vmatpush.msra.mxu0 %v1122
    %1219 = vmatpush.msra.mxu0 %v1121
    %1220 = vmatpush.msra.mxu0 %v1120
    %1221 = vmatmul.f32.gmra.mxu0 %v993
    %v1222 = vpop.f32.mrf.mxu0
    %v1223 = vadd.f32 %v1200, %v1222
    %1224 = vmatmul.f32.gmra.mxu0 %v996
    %v1225 = vpop.f32.mrf.mxu0
    %v1226 = vadd.f32 %v1203, %v1225
    %1227 = vdwg.mxu0
    %v1228 = vmul.f32 %v1223, %v1056
    %v1229 = vmul.f32 %v1226, %v1071
    %v1230 = vmul.f32 %v1228, 1.442695
    %v1231 = vpow.pop %v1230
    %v1232 = vmul.f32 %v1229, 1.442695
    %v1233 = vpow.pop %v1232
    %v1234 = vld [vmem:[%s4] sm:$0xff]
    %v1235 = vld [vmem:[%s4 + $0x8] sm:$0xff]
    %v1236 = vld [vmem:[%s4 + $0x10] sm:$0xff]
    %v1237 = vld [vmem:[%s4 + $0x18] sm:$0xff]
    %v1238 = vld [vmem:[%s4 + $0x20] sm:$0xff]
    %v1239 = vld [vmem:[%s4 + $0x28] sm:$0xff]
    %v1240 = vld [vmem:[%s4 + $0x30] sm:$0xff]
    %v1241 = vld [vmem:[%s4 + $0x38] sm:$0xff]
    %v1242 = vld [vmem:[%s4 + $0x40] sm:$0xff]
    %v1243 = vld [vmem:[%s4 + $0x48] sm:$0xff]
    %v1244 = vld [vmem:[%s4 + $0x50] sm:$0xff]
    %v1245 = vld [vmem:[%s4 + $0x58] sm:$0xff]
    %v1246 = vld [vmem:[%s4 + $0x60] sm:$0xff]
    %v1247 = vld [vmem:[%s4 + $0x68] sm:$0xff]
    %v1248 = vld [vmem:[%s4 + $0x70] sm:$0xff]
    %v1249 = vld [vmem:[%s4 + $0x78] sm:$0xff]
    %v1250 = vld [vmem:[%s4 + $0x80] sm:$0xff]
    %v1251 = vld [vmem:[%s4 + $0x88] sm:$0xff]
    %v1252 = vld [vmem:[%s4 + $0x90] sm:$0xff]
    %v1253 = vld [vmem:[%s4 + $0x98] sm:$0xff]
    %v1254 = vld [vmem:[%s4 + $0xa0] sm:$0xff]
    %v1255 = vld [vmem:[%s4 + $0xa8] sm:$0xff]
    %v1256 = vld [vmem:[%s4 + $0xb0] sm:$0xff]
    %v1257 = vld [vmem:[%s4 + $0xb8] sm:$0xff]
    %v1258 = vld [vmem:[%s4 + $0xc0] sm:$0xff]
    %v1259 = vld [vmem:[%s4 + $0xc8] sm:$0xff]
    %v1260 = vld [vmem:[%s4 + $0xd0] sm:$0xff]
    %v1261 = vld [vmem:[%s4 + $0xd8] sm:$0xff]
    %v1262 = vld [vmem:[%s4 + $0xe0] sm:$0xff]
    %v1263 = vld [vmem:[%s4 + $0xe8] sm:$0xff]
    %v1264 = vld [vmem:[%s4 + $0xf0] sm:$0xff]
    %v1265 = vld [vmem:[%s4 + $0xf8] sm:$0xff]
    %v1266 = vld [vmem:[%s4 + $0x100] sm:$0xff]
    %v1267 = vld [vmem:[%s4 + $0x108] sm:$0xff]
    %v1268 = vld [vmem:[%s4 + $0x110] sm:$0xff]
    %v1269 = vld [vmem:[%s4 + $0x118] sm:$0xff]
    %v1270 = vld [vmem:[%s4 + $0x120] sm:$0xff]
    %v1271 = vld [vmem:[%s4 + $0x128] sm:$0xff]
    %v1272 = vld [vmem:[%s4 + $0x130] sm:$0xff]
    %v1273 = vld [vmem:[%s4 + $0x138] sm:$0xff]
    %v1274 = vld [vmem:[%s4 + $0x140] sm:$0xff]
    %v1275 = vld [vmem:[%s4 + $0x148] sm:$0xff]
    %v1276 = vld [vmem:[%s4 + $0x150] sm:$0xff]
    %v1277 = vld [vmem:[%s4 + $0x158] sm:$0xff]
    %v1278 = vld [vmem:[%s4 + $0x160] sm:$0xff]
    %v1279 = vld [vmem:[%s4 + $0x168] sm:$0xff]
    %v1280 = vld [vmem:[%s4 + $0x170] sm:$0xff]
    %v1281 = vld [vmem:[%s4 + $0x178] sm:$0xff]
    %v1282 = vld [vmem:[%s4 + $0x180] sm:$0xff]
    %v1283 = vld [vmem:[%s4 + $0x188] sm:$0xff]
    %v1284 = vld [vmem:[%s4 + $0x190] sm:$0xff]
    %v1285 = vld [vmem:[%s4 + $0x198] sm:$0xff]
    %v1286 = vld [vmem:[%s4 + $0x1a0] sm:$0xff]
    %v1287 = vld [vmem:[%s4 + $0x1a8] sm:$0xff]
    %v1288 = vld [vmem:[%s4 + $0x1b0] sm:$0xff]
    %v1289 = vld [vmem:[%s4 + $0x1b8] sm:$0xff]
    %v1290 = vld [vmem:[%s4 + $0x1c0] sm:$0xff]
    %v1291 = vld [vmem:[%s4 + $0x1c8] sm:$0xff]
    %v1292 = vld [vmem:[%s4 + $0x1d0] sm:$0xff]
    %v1293 = vld [vmem:[%s4 + $0x1d8] sm:$0xff]
    %v1294 = vld [vmem:[%s4 + $0x1e0] sm:$0xff]
    %v1295 = vld [vmem:[%s4 + $0x1e8] sm:$0xff]
    %v1296 = vld [vmem:[%s4 + $0x1f0] sm:$0xff]
    %v1297 = vld [vmem:[%s4 + $0x1f8] sm:$0xff]
    %v1298 = vld [vmem:[%s5] sm:$0xff]
    %vm1299 = vcmask 64512
    %v1300 = vsel %vm1299, %v1231, 0.0
    %v1301 = vrot.slane %v1300, 4
    %v1302 = vadd.f32 %v1300, %v1301
    %v1303 = vrot.slane %v1302, 2
    %v1304 = vadd.f32 %v1302, %v1303
    %v1305 = vrot.slane %v1304, 1
    %v1306 = vadd.f32 %v1304, %v1305
    %v1307 = vrcp.pop %v1306
    %v1308 = vmul.f32 %v1306, %v1307
    %v1309 = vsub.f32 1.0, %v1308
    %v1310 = vmul.f32 %v1307, %v1309
    %v1311 = vadd.f32 %v1307, %v1310
    %vm1312 = vweird.f32 %v1306
    %vm1313 = vweird.f32 %v1307
    %vm1314 = vmor %vm1312, %vm1313
    %v1315 = vsel %vm1314, %v1307, %v1311
    %v1316 = vand.u32 2147483647, %v1306
    %vm1317 = vcmp.eq.f32.partialorder %v1316, 8.507059e+37
    %v1318 = vand.u32 %v1306, 2147483648
    %v1319 = vor.u32 1.1754944e-38, %v1318
    %v1320 = vsel %vm1317, %v1319, %v1315
    %v1321 = vmul.f32 1.0, %v1320
    %v1322 = vmul.f32 %v1231, %v1321
    %1323 = vxpose.xlu0.b32.start [1/16] %v1322, 128
    %1324 = vxpose.xlu0.b32.cont [2/16] 0.0, 128
    %1325 = vxpose.xlu0.b32.cont [3/16] 0.0, 128
    %1326 = vxpose.xlu0.b32.cont [4/16] 0.0, 128
    %1327 = vxpose.xlu0.b32.cont [5/16] 0.0, 128
    %1328 = vxpose.xlu0.b32.cont [6/16] 0.0, 128
    %1329 = vxpose.xlu0.b32.cont [7/16] 0.0, 128
    %1330 = vxpose.xlu0.b32.cont [8/16] 0.0, 128
    %1331 = vxpose.xlu0.b32.cont [9/16] 0.0, 128
    %1332 = vxpose.xlu0.b32.cont [10/16] 0.0, 128
    %1333 = vxpose.xlu0.b32.cont [11/16] 0.0, 128
    %1334 = vxpose.xlu0.b32.cont [12/16] 0.0, 128
    %1335 = vxpose.xlu0.b32.cont [13/16] 0.0, 128
    %1336 = vxpose.xlu0.b32.cont [14/16] 0.0, 128
    %1337 = vxpose.xlu0.b32.cont [15/16] 0.0, 128
    %1338 = vxpose.xlu0.b32.end [16/16] 0.0, 128
    %v1339 = vpop.trf.xlu0
    %v1340 = vpop.trf.xlu0
    %v1341 = vpop.trf.xlu0
    %v1342 = vpop.trf.xlu0
    %v1343 = vpop.trf.xlu0
    %v1344 = vpop.trf.xlu0
    %v1345 = vpop.trf.xlu0
    %v1346 = vpop.trf.xlu0
    %v1347 = vpop.trf.xlu0
    %v1348 = vpop.trf.xlu0
    %v1349 = vpop.trf.xlu0
    %v1350 = vpop.trf.xlu0
    %v1351 = vpop.trf.xlu0
    %v1352 = vpop.trf.xlu0
    %v1353 = vpop.trf.xlu0
    %v1354 = vpop.trf.xlu0
    %v1356 = vsel %vm1299, %v1339, 0
    %1358 = vmatpush.msra.mxu0 0.0
    %1359 = vmatpush.msra.mxu0 0.0
    %1360 = vmatpush.msra.mxu0 0.0
    %1361 = vmatpush.msra.mxu0 0.0
    %1362 = vmatpush.msra.mxu0 0.0
    %1363 = vmatpush.msra.mxu0 0.0
    %1364 = vmatpush.msra.mxu0 0.0
    %1365 = vmatpush.msra.mxu0 0.0
    %1366 = vmatpush.msra.mxu0 0.0
    %1367 = vmatpush.msra.mxu0 0.0
    %1368 = vmatpush.msra.mxu0 0.0
    %1369 = vmatpush.msra.mxu0 0.0
    %1370 = vmatpush.msra.mxu0 0.0
    %1371 = vmatpush.msra.mxu0 0.0
    %1372 = vmatpush.msra.mxu0 0.0
    %1373 = vmatpush.msra.mxu0 %v318
    %1374 = vmatmul.f32.gmra.mxu0 %v1356
    %v1375 = vpop.f32.mrf.mxu0
    %v1376 = vadd.f32 0.0, %v1375
    %1377 = vdwg.mxu0
    %1378 = vmatpush.msra.mxu0 0.0
    %1379 = vmatpush.msra.mxu0 0.0
    %1380 = vmatpush.msra.mxu0 0.0
    %1381 = vmatpush.msra.mxu0 0.0
    %1382 = vmatpush.msra.mxu0 0.0
    %1383 = vmatpush.msra.mxu0 0.0
    %1384 = vmatpush.msra.mxu0 0.0
    %1385 = vmatpush.msra.mxu0 0.0
    %1386 = vmatpush.msra.mxu0 0.0
    %1387 = vmatpush.msra.mxu0 0.0
    %1388 = vmatpush.msra.mxu0 0.0
    %1389 = vmatpush.msra.mxu0 0.0
    %1390 = vmatpush.msra.mxu0 0.0
    %1391 = vmatpush.msra.mxu0 0.0
    %1392 = vmatpush.msra.mxu0 0.0
    %1393 = vmatpush.msra.mxu0 %v387
    %1394 = vmatmul.f32.gmra.mxu0 %v1356
    %v1395 = vpop.f32.mrf.mxu0
    %v1396 = vadd.f32 0.0, %v1395
    %1397 = vdwg.mxu0
    %1398 = vmatpush.msra.mxu0 0.0
    %1399 = vmatpush.msra.mxu0 0.0
    %1400 = vmatpush.msra.mxu0 0.0
    %1401 = vmatpush.msra.mxu0 0.0
    %1402 = vmatpush.msra.mxu0 0.0
    %1403 = vmatpush.msra.mxu0 0.0
    %1404 = vmatpush.msra.mxu0 0.0
    %1405 = vmatpush.msra.mxu0 0.0
    %1406 = vmatpush.msra.mxu0 0.0
    %1407 = vmatpush.msra.mxu0 0.0
    %1408 = vmatpush.msra.mxu0 0.0
    %1409 = vmatpush.msra.mxu0 0.0
    %1410 = vmatpush.msra.mxu0 0.0
    %1411 = vmatpush.msra.mxu0 0.0
    %1412 = vmatpush.msra.mxu0 0.0
    %1413 = vmatpush.msra.mxu0 %v456
    %1414 = vmatmul.f32.gmra.mxu0 %v1356
    %v1415 = vpop.f32.mrf.mxu0
    %v1416 = vadd.f32 0.0, %v1415
    %1417 = vdwg.mxu0
    %1418 = vmatpush.msra.mxu0 0.0
    %1419 = vmatpush.msra.mxu0 0.0
    %1420 = vmatpush.msra.mxu0 0.0
    %1421 = vmatpush.msra.mxu0 0.0
    %1422 = vmatpush.msra.mxu0 0.0
    %1423 = vmatpush.msra.mxu0 0.0
    %1424 = vmatpush.msra.mxu0 0.0
    %1425 = vmatpush.msra.mxu0 0.0
    %1426 = vmatpush.msra.mxu0 0.0
    %1427 = vmatpush.msra.mxu0 0.0
    %1428 = vmatpush.msra.mxu0 0.0
    %1429 = vmatpush.msra.mxu0 0.0
    %1430 = vmatpush.msra.mxu0 0.0
    %1431 = vmatpush.msra.mxu0 0.0
    %1432 = vmatpush.msra.mxu0 0.0
    %1433 = vmatpush.msra.mxu0 %v525
    %1434 = vmatmul.f32.gmra.mxu0 %v1356
    %v1435 = vpop.f32.mrf.mxu0
    %v1436 = vadd.f32 0.0, %v1435
    %1437 = vdwg.mxu0
    %1438 = vmatpush.msra.mxu0 %v1249
    %1439 = vmatpush.msra.mxu0 %v1248
    %1440 = vmatpush.msra.mxu0 %v1247
    %1441 = vmatpush.msra.mxu0 %v1246
    %1442 = vmatpush.msra.mxu0 %v1245
    %1443 = vmatpush.msra.mxu0 %v1244
    %1444 = vmatpush.msra.mxu0 %v1243
    %1445 = vmatpush.msra.mxu0 %v1242
    %1446 = vmatpush.msra.mxu0 %v1241
    %1447 = vmatpush.msra.mxu0 %v1240
    %1448 = vmatpush.msra.mxu0 %v1239
    %1449 = vmatpush.msra.mxu0 %v1238
    %1450 = vmatpush.msra.mxu0 %v1237
    %1451 = vmatpush.msra.mxu0 %v1236
    %1452 = vmatpush.msra.mxu0 %v1235
    %1453 = vmatpush.msra.mxu0 %v1234
    %1454 = vmatmul.f32.gmra.mxu0 %v1376
    %v1455 = vpop.f32.mrf.mxu0
    %v1456 = vadd.f32 %v1298, %v1455
    %1457 = vdwg.mxu0
    %1458 = vmatpush.msra.mxu0 %v1265
    %1459 = vmatpush.msra.mxu0 %v1264
    %1460 = vmatpush.msra.mxu0 %v1263
    %1461 = vmatpush.msra.mxu0 %v1262
    %1462 = vmatpush.msra.mxu0 %v1261
    %1463 = vmatpush.msra.mxu0 %v1260
    %1464 = vmatpush.msra.mxu0 %v1259
    %1465 = vmatpush.msra.mxu0 %v1258
    %1466 = vmatpush.msra.mxu0 %v1257
    %1467 = vmatpush.msra.mxu0 %v1256
    %1468 = vmatpush.msra.mxu0 %v1255
    %1469 = vmatpush.msra.mxu0 %v1254
    %1470 = vmatpush.msra.mxu0 %v1253
    %1471 = vmatpush.msra.mxu0 %v1252
    %1472 = vmatpush.msra.mxu0 %v1251
    %1473 = vmatpush.msra.mxu0 %v1250
    %1474 = vmatmul.f32.gmra.mxu0 %v1396
    %v1475 = vpop.f32.mrf.mxu0
    %v1476 = vadd.f32 %v1456, %v1475
    %1477 = vdwg.mxu0
    %1478 = vmatpush.msra.mxu0 %v1281
    %1479 = vmatpush.msra.mxu0 %v1280
    %1480 = vmatpush.msra.mxu0 %v1279
    %1481 = vmatpush.msra.mxu0 %v1278
    %1482 = vmatpush.msra.mxu0 %v1277
    %1483 = vmatpush.msra.mxu0 %v1276
    %1484 = vmatpush.msra.mxu0 %v1275
    %1485 = vmatpush.msra.mxu0 %v1274
    %1486 = vmatpush.msra.mxu0 %v1273
    %1487 = vmatpush.msra.mxu0 %v1272
    %1488 = vmatpush.msra.mxu0 %v1271
    %1489 = vmatpush.msra.mxu0 %v1270
    %1490 = vmatpush.msra.mxu0 %v1269
    %1491 = vmatpush.msra.mxu0 %v1268
    %1492 = vmatpush.msra.mxu0 %v1267
    %1493 = vmatpush.msra.mxu0 %v1266
    %1494 = vmatmul.f32.gmra.mxu0 %v1416
    %v1495 = vpop.f32.mrf.mxu0
    %v1496 = vadd.f32 %v1476, %v1495
    %1497 = vdwg.mxu0
    %1498 = vmatpush.msra.mxu0 %v1297
    %1499 = vmatpush.msra.mxu0 %v1296
    %1500 = vmatpush.msra.mxu0 %v1295
    %1501 = vmatpush.msra.mxu0 %v1294
    %1502 = vmatpush.msra.mxu0 %v1293
    %1503 = vmatpush.msra.mxu0 %v1292
    %1504 = vmatpush.msra.mxu0 %v1291
    %1505 = vmatpush.msra.mxu0 %v1290
    %1506 = vmatpush.msra.mxu0 %v1289
    %1507 = vmatpush.msra.mxu0 %v1288
    %1508 = vmatpush.msra.mxu0 %v1287
    %1509 = vmatpush.msra.mxu0 %v1286
    %1510 = vmatpush.msra.mxu0 %v1285
    %1511 = vmatpush.msra.mxu0 %v1284
    %1512 = vmatpush.msra.mxu0 %v1283
    %1513 = vmatpush.msra.mxu0 %v1282
    %1514 = vmatmul.f32.gmra.mxu0 %v1436
    %v1515 = vpop.f32.mrf.mxu0
    %v1516 = vadd.f32 %v1496, %v1515
    %1517 = vdwg.mxu0
    %1518 = vst [vmem:[#allocation7] sm:$0xff] %v1516
    %v1519 = vsel %vm1299, %v1233, 0.0
    %v1520 = vrot.slane %v1519, 4
    %v1521 = vadd.f32 %v1519, %v1520
    %v1522 = vrot.slane %v1521, 2
    %v1523 = vadd.f32 %v1521, %v1522
    %v1524 = vrot.slane %v1523, 1
    %v1525 = vadd.f32 %v1523, %v1524
    %v1526 = vrcp.pop %v1525
    %v1527 = vmul.f32 %v1525, %v1526
    %v1528 = vsub.f32 1.0, %v1527
    %v1529 = vmul.f32 %v1526, %v1528
    %v1530 = vadd.f32 %v1526, %v1529
    %vm1531 = vweird.f32 %v1525
    %vm1532 = vweird.f32 %v1526
    %vm1533 = vmor %vm1531, %vm1532
    %v1534 = vsel %vm1533, %v1526, %v1530
    %v1535 = vand.u32 2147483647, %v1525
    %vm1536 = vcmp.eq.f32.partialorder %v1535, 8.507059e+37
    %v1537 = vand.u32 %v1525, 2147483648
    %v1538 = vor.u32 1.1754944e-38, %v1537
    %v1539 = vsel %vm1536, %v1538, %v1534
    %v1540 = vmul.f32 1.0, %v1539
    %v1541 = vmul.f32 %v1233, %v1540
    %1542 = vxpose.xlu0.b32.start [1/16] %v1541, 128
    %1543 = vxpose.xlu0.b32.cont [2/16] 0.0, 128
    %1544 = vxpose.xlu0.b32.cont [3/16] 0.0, 128
    %1545 = vxpose.xlu0.b32.cont [4/16] 0.0, 128
    %1546 = vxpose.xlu0.b32.cont [5/16] 0.0, 128
    %1547 = vxpose.xlu0.b32.cont [6/16] 0.0, 128
    %1548 = vxpose.xlu0.b32.cont [7/16] 0.0, 128
    %1549 = vxpose.xlu0.b32.cont [8/16] 0.0, 128
    %1550 = vxpose.xlu0.b32.cont [9/16] 0.0, 128
    %1551 = vxpose.xlu0.b32.cont [10/16] 0.0, 128
    %1552 = vxpose.xlu0.b32.cont [11/16] 0.0, 128
    %1553 = vxpose.xlu0.b32.cont [12/16] 0.0, 128
    %1554 = vxpose.xlu0.b32.cont [13/16] 0.0, 128
    %1555 = vxpose.xlu0.b32.cont [14/16] 0.0, 128
    %1556 = vxpose.xlu0.b32.cont [15/16] 0.0, 128
    %1557 = vxpose.xlu0.b32.end [16/16] 0.0, 128
    %v1558 = vpop.trf.xlu0
    %v1559 = vpop.trf.xlu0
    %v1560 = vpop.trf.xlu0
    %v1561 = vpop.trf.xlu0
    %v1562 = vpop.trf.xlu0
    %v1563 = vpop.trf.xlu0
    %v1564 = vpop.trf.xlu0
    %v1565 = vpop.trf.xlu0
    %v1566 = vpop.trf.xlu0
    %v1567 = vpop.trf.xlu0
    %v1568 = vpop.trf.xlu0
    %v1569 = vpop.trf.xlu0
    %v1570 = vpop.trf.xlu0
    %v1571 = vpop.trf.xlu0
    %v1572 = vpop.trf.xlu0
    %v1573 = vpop.trf.xlu0
    %v1575 = vsel %vm1299, %v1558, 0
    %1577 = vmatpush.msra.mxu0 0.0
    %1578 = vmatpush.msra.mxu0 0.0
    %1579 = vmatpush.msra.mxu0 0.0
    %1580 = vmatpush.msra.mxu0 0.0
    %1581 = vmatpush.msra.mxu0 0.0
    %1582 = vmatpush.msra.mxu0 0.0
    %1583 = vmatpush.msra.mxu0 0.0
    %1584 = vmatpush.msra.mxu0 0.0
    %1585 = vmatpush.msra.mxu0 0.0
    %1586 = vmatpush.msra.mxu0 0.0
    %1587 = vmatpush.msra.mxu0 0.0
    %1588 = vmatpush.msra.mxu0 0.0
    %1589 = vmatpush.msra.mxu0 0.0
    %1590 = vmatpush.msra.mxu0 0.0
    %1591 = vmatpush.msra.mxu0 0.0
    %1592 = vmatpush.msra.mxu0 %v321
    %1593 = vmatmul.f32.gmra.mxu0 %v1575
    %v1594 = vpop.f32.mrf.mxu0
    %v1595 = vadd.f32 0.0, %v1594
    %1596 = vdwg.mxu0
    %1597 = vmatpush.msra.mxu0 0.0
    %1598 = vmatpush.msra.mxu0 0.0
    %1599 = vmatpush.msra.mxu0 0.0
    %1600 = vmatpush.msra.mxu0 0.0
    %1601 = vmatpush.msra.mxu0 0.0
    %1602 = vmatpush.msra.mxu0 0.0
    %1603 = vmatpush.msra.mxu0 0.0
    %1604 = vmatpush.msra.mxu0 0.0
    %1605 = vmatpush.msra.mxu0 0.0
    %1606 = vmatpush.msra.mxu0 0.0
    %1607 = vmatpush.msra.mxu0 0.0
    %1608 = vmatpush.msra.mxu0 0.0
    %1609 = vmatpush.msra.mxu0 0.0
    %1610 = vmatpush.msra.mxu0 0.0
    %1611 = vmatpush.msra.mxu0 0.0
    %1612 = vmatpush.msra.mxu0 %v390
    %1613 = vmatmul.f32.gmra.mxu0 %v1575
    %v1614 = vpop.f32.mrf.mxu0
    %v1615 = vadd.f32 0.0, %v1614
    %1616 = vdwg.mxu0
    %1617 = vmatpush.msra.mxu0 0.0
    %1618 = vmatpush.msra.mxu0 0.0
    %1619 = vmatpush.msra.mxu0 0.0
    %1620 = vmatpush.msra.mxu0 0.0
    %1621 = vmatpush.msra.mxu0 0.0
    %1622 = vmatpush.msra.mxu0 0.0
    %1623 = vmatpush.msra.mxu0 0.0
    %1624 = vmatpush.msra.mxu0 0.0
    %1625 = vmatpush.msra.mxu0 0.0
    %1626 = vmatpush.msra.mxu0 0.0
    %1627 = vmatpush.msra.mxu0 0.0
    %1628 = vmatpush.msra.mxu0 0.0
    %1629 = vmatpush.msra.mxu0 0.0
    %1630 = vmatpush.msra.mxu0 0.0
    %1631 = vmatpush.msra.mxu0 0.0
    %1632 = vmatpush.msra.mxu0 %v459
    %1633 = vmatmul.f32.gmra.mxu0 %v1575
    %v1634 = vpop.f32.mrf.mxu0
    %v1635 = vadd.f32 0.0, %v1634
    %1636 = vdwg.mxu0
    %1637 = vmatpush.msra.mxu0 0.0
    %1638 = vmatpush.msra.mxu0 0.0
    %1639 = vmatpush.msra.mxu0 0.0
    %1640 = vmatpush.msra.mxu0 0.0
    %1641 = vmatpush.msra.mxu0 0.0
    %1642 = vmatpush.msra.mxu0 0.0
    %1643 = vmatpush.msra.mxu0 0.0
    %1644 = vmatpush.msra.mxu0 0.0
    %1645 = vmatpush.msra.mxu0 0.0
    %1646 = vmatpush.msra.mxu0 0.0
    %1647 = vmatpush.msra.mxu0 0.0
    %1648 = vmatpush.msra.mxu0 0.0
    %1649 = vmatpush.msra.mxu0 0.0
    %1650 = vmatpush.msra.mxu0 0.0
    %1651 = vmatpush.msra.mxu0 0.0
    %1652 = vmatpush.msra.mxu0 %v528
    %1653 = vmatmul.f32.gmra.mxu0 %v1575
    %v1654 = vpop.f32.mrf.mxu0
    %v1655 = vadd.f32 0.0, %v1654
    %1656 = vdwg.mxu0
    %1657 = vmatpush.msra.mxu0 %v1249
    %1658 = vmatpush.msra.mxu0 %v1248
    %1659 = vmatpush.msra.mxu0 %v1247
    %1660 = vmatpush.msra.mxu0 %v1246
    %1661 = vmatpush.msra.mxu0 %v1245
    %1662 = vmatpush.msra.mxu0 %v1244
    %1663 = vmatpush.msra.mxu0 %v1243
    %1664 = vmatpush.msra.mxu0 %v1242
    %1665 = vmatpush.msra.mxu0 %v1241
    %1666 = vmatpush.msra.mxu0 %v1240
    %1667 = vmatpush.msra.mxu0 %v1239
    %1668 = vmatpush.msra.mxu0 %v1238
    %1669 = vmatpush.msra.mxu0 %v1237
    %1670 = vmatpush.msra.mxu0 %v1236
    %1671 = vmatpush.msra.mxu0 %v1235
    %1672 = vmatpush.msra.mxu0 %v1234
    %1673 = vmatmul.f32.gmra.mxu0 %v1595
    %v1674 = vpop.f32.mrf.mxu0
    %v1675 = vadd.f32 %v1298, %v1674
    %1676 = vdwg.mxu0
    %1677 = vmatpush.msra.mxu0 %v1265
    %1678 = vmatpush.msra.mxu0 %v1264
    %1679 = vmatpush.msra.mxu0 %v1263
    %1680 = vmatpush.msra.mxu0 %v1262
    %1681 = vmatpush.msra.mxu0 %v1261
    %1682 = vmatpush.msra.mxu0 %v1260
    %1683 = vmatpush.msra.mxu0 %v1259
    %1684 = vmatpush.msra.mxu0 %v1258
    %1685 = vmatpush.msra.mxu0 %v1257
    %1686 = vmatpush.msra.mxu0 %v1256
    %1687 = vmatpush.msra.mxu0 %v1255
    %1688 = vmatpush.msra.mxu0 %v1254
    %1689 = vmatpush.msra.mxu0 %v1253
    %1690 = vmatpush.msra.mxu0 %v1252
    %1691 = vmatpush.msra.mxu0 %v1251
    %1692 = vmatpush.msra.mxu0 %v1250
    %1693 = vmatmul.f32.gmra.mxu0 %v1615
    %v1694 = vpop.f32.mrf.mxu0
    %v1695 = vadd.f32 %v1675, %v1694
    %1696 = vdwg.mxu0
    %1697 = vmatpush.msra.mxu0 %v1281
    %1698 = vmatpush.msra.mxu0 %v1280
    %1699 = vmatpush.msra.mxu0 %v1279
    %1700 = vmatpush.msra.mxu0 %v1278
    %1701 = vmatpush.msra.mxu0 %v1277
    %1702 = vmatpush.msra.mxu0 %v1276
    %1703 = vmatpush.msra.mxu0 %v1275
    %1704 = vmatpush.msra.mxu0 %v1274
    %1705 = vmatpush.msra.mxu0 %v1273
    %1706 = vmatpush.msra.mxu0 %v1272
    %1707 = vmatpush.msra.mxu0 %v1271
    %1708 = vmatpush.msra.mxu0 %v1270
    %1709 = vmatpush.msra.mxu0 %v1269
    %1710 = vmatpush.msra.mxu0 %v1268
    %1711 = vmatpush.msra.mxu0 %v1267
    %1712 = vmatpush.msra.mxu0 %v1266
    %1713 = vmatmul.f32.gmra.mxu0 %v1635
    %v1714 = vpop.f32.mrf.mxu0
    %v1715 = vadd.f32 %v1695, %v1714
    %1716 = vdwg.mxu0
    %1717 = vmatpush.msra.mxu0 %v1297
    %1718 = vmatpush.msra.mxu0 %v1296
    %1719 = vmatpush.msra.mxu0 %v1295
    %1720 = vmatpush.msra.mxu0 %v1294
    %1721 = vmatpush.msra.mxu0 %v1293
    %1722 = vmatpush.msra.mxu0 %v1292
    %1723 = vmatpush.msra.mxu0 %v1291
    %1724 = vmatpush.msra.mxu0 %v1290
    %1725 = vmatpush.msra.mxu0 %v1289
    %1726 = vmatpush.msra.mxu0 %v1288
    %1727 = vmatpush.msra.mxu0 %v1287
    %1728 = vmatpush.msra.mxu0 %v1286
    %1729 = vmatpush.msra.mxu0 %v1285
    %1730 = vmatpush.msra.mxu0 %v1284
    %1731 = vmatpush.msra.mxu0 %v1283
    %1732 = vmatpush.msra.mxu0 %v1282
    %1733 = vmatmul.f32.gmra.mxu0 %v1655
    %v1734 = vpop.f32.mrf.mxu0
    %v1735 = vadd.f32 %v1715, %v1734
    %1736 = vdwg.mxu0
    %s1737 = scalar_lea.vmem [#allocation7], 8
    %1738 = vst [vmem:[%s1737] sm:$0xff] %v1735
    // Predicated region
    $region34: #{_forward_pallas.1} parent=1 // pred_check
      _
    $region35: #{_forward_pallas.1} parent=1 // pred_check_branch
      %1740 = sbr.rel (0) target = $region37
    $region36: #{_forward_pallas.1} parent=1 // pred_region
      %1742 = vsyncadd [#allocation4], 0
      %s1743 = sshll.u32 [#allocation7], 4
      %s1744 = int_to_ptr.vmem [resolvable:$true] %s1743
      %s1745 = sshll.u32 %s6, 4
      %s1746 = int_to_ptr.hbm [resolvable:$true] %s1745
      %1751 = dma.vmem_to_hbm [thread:$0]  %s1744, 256, %s1746, [#allocation4], 128, 128, 8
    $region37: #{_forward_pallas.1} parent=1 // pred_fallthru
      _
    // Predicated region
    $region38: #{_forward_pallas.1} parent=1 // pred_check
      _
    $region39: #{_forward_pallas.1} parent=1 // pred_check_branch
      %1753 = sbr.rel (0) target = $region41
    $region40: #{_forward_pallas.1} parent=1 // pred_region
      %1755 = dma.done [#allocation4], 256
    $region41: #{_forward_pallas.1} parent=1 // pred_fallthru
      _
    %1756 = vsyncpa [#allocation3], 1
    %1757 = vsyncpa [#allocation6], 1
    %1758 = vsyncpa [#allocation4], 1

</llo_original>
